<compile_context>
chip_gen: v6e
topology: v6e:2x2x1
jax: 0.10.0
libtpu: 0.0.40
codegen_flags: <defaults>
</compile_context>

<pallas_src>
import functools

import numpy as np
import jax
import jax.numpy as jnp
from jax.experimental import pallas as pl
from jax.experimental.pallas import tpu as pltpu


def _round_up(x, m):
    return ((x + m - 1) // m) * m


# ------------------------- one-time parameter packing ------------------------- #
def pack_cnn_text_params(conv_ws, conv_bs, fc_w, fc_b, Ks, Knum, Cla, L):
    """Pack torch-layout CNN_Text params into the lane-dense kernel layout (init-time).

    conv_ws[idx]: (Knum, K, D)   (Conv2d(1, Knum, (K, D)) weight with in_ch squeezed)
    conv_bs[idx]: (Knum,)
    fc_w:         (Cla, len(Ks)*Knum)   (torch Linear weight layout)
    fc_b:         (Cla,)
    """
    n_ks = len(Ks)
    K_max, K_min = max(Ks), min(Ks)
    D = int(conv_ws[0].shape[-1])
    F = n_ks * Knum
    F_pad = _round_up(F, 128)
    Cla_pad = _round_up(max(Cla, 1), 128)
    T_out = _round_up(L - K_min + 1, 8)          # time positions computed in-kernel
    # (padded time length L_pad = T_out + K_max - 1 is derived in the wrapper)

    # Per-shift weights: shift k, all convs' output channels in disjoint lane bands.
    w_stack = np.zeros((K_max, D, F_pad), np.float32)
    bias_p = np.zeros((1, F_pad), np.float32)
    mask = np.zeros((T_out, F_pad), np.float32)  # 1.0 at valid (t, feature-lane)
    for idx, K in enumerate(Ks):
        w = np.asarray(conv_ws[idx], np.float32)           # (Knum, K, D)
        lo, hi = idx * Knum, (idx + 1) * Knum
        for k in range(K):
            w_stack[k, :, lo:hi] = w[:, k, :].T             # (D, Knum)
        bias_p[0, lo:hi] = np.asarray(conv_bs[idx], np.float32)
        mask[: L - K + 1, lo:hi] = 1.0

    fc_w_p = np.zeros((F_pad, Cla_pad), np.float32)
    fc_w_p[:F, :Cla] = np.asarray(fc_w, np.float32).T       # (F, Cla)
    fc_b_p = np.zeros((1, Cla_pad), np.float32)
    fc_b_p[0, :Cla] = np.asarray(fc_b, np.float32)

    return {
        "conv_w": jnp.asarray(w_stack, jnp.bfloat16),        # (K_max, D, F_pad)
        "conv_b": jnp.asarray(bias_p, jnp.float32),          # (1, F_pad)
        "mask": jnp.asarray(mask, jnp.float32),              # (T_out, F_pad)
        "fc_w": jnp.asarray(fc_w_p, jnp.float32),             # (F_pad, Cla_pad)
        "fc_b": jnp.asarray(fc_b_p, jnp.float32),             # (1, Cla_pad)
    }


# --------------------------------- Pallas kernel ------------------------------- #
def _make_cnn_text_kernel(TB, T_out, K_max, D, F_pad):
    def kernel(emb_ref, w_ref, b_ref, mask_ref, fc_w_ref, fc_b_ref, out_ref):
        emb = emb_ref[...]                                    # (TB, L_pad, D) bf16

        # Shared accumulator for all kernel sizes: one lane-dense MXU matmul per shift,
        # batch x time flattened so M = TB*T_out per push.
        acc = jnp.zeros((TB * T_out, F_pad), jnp.float32)
        for k in range(K_max):                                # static unroll, K_max <= 5
            lhs = emb[:, k:k + T_out, :].reshape(TB * T_out, D)
            acc = acc + jnp.dot(lhs, w_ref[k],
                                preferred_element_type=jnp.float32)

        acc = jnp.maximum(acc + b_ref[...], 0.0)              # bias + ReLU (f32, VPU)
        # Zero out time positions that are invalid for each conv's band; exact because
        # ReLU outputs are >= 0 so the max-over-time is unchanged.
        acc = acc.reshape(TB, T_out, F_pad) * mask_ref[...][None, :, :]
        feat = jnp.max(acc, axis=1)                           # (TB, F_pad) f32

        # TODO(synk): dropout is identity in eval mode; no RNG applied.
        logit = jnp.dot(feat, fc_w_ref[...],
                        preferred_element_type=jnp.float32) + fc_b_ref[...]
        out_ref[...] = logit.astype(out_ref.dtype)            # (TB, Cla_pad)

    return kernel


# ---------------------------------- host wrapper -------------------------------- #
def cnn_text_forward(tokens, embed_table, packed, *, class_num):
    """Embedding gather + batch/time zero-padding in JAX glue; the rest in one kernel."""
    w_stack, conv_b = packed["conv_w"], packed["conv_b"]
    mask, fc_w, fc_b = packed["mask"], packed["fc_w"], packed["fc_b"]

    B, L = tokens.shape
    D = embed_table.shape[1]
    K_max, _, F_pad = w_stack.shape
    T_out = mask.shape[0]
    L_pad = T_out + K_max - 1
    Cla_pad = fc_w.shape[1]

    # Batch tiling: TB multiple of 8 sublanes, capped at 128 (raiseable on v5e/v6e's
    # 128 MiB VMEM at production batch).  Prefer >= 2 grid steps so the "parallel"
    # batch axis can shard across v7x's two TensorCores.
    TB = min(_round_up(B, 8), 128)
    n_tiles = pl.cdiv(B, TB)
    if n_tiles == 1 and TB > 8:
        TB = _round_up(pl.cdiv(TB, 2), 8)
        n_tiles = pl.cdiv(B, TB)
    B_pad = n_tiles * TB

    # Embedding gather (XLA gather); pad batch rows and the time axis with zeros so
    # every shifted read in the kernel stays in-bounds (invalid positions are masked).
    emb = jnp.take(embed_table, tokens, axis=0).astype(jnp.bfloat16)   # (B, L, D)
    emb = jnp.pad(emb, ((0, B_pad - B), (0, L_pad - L), (0, 0)))

    kernel = _make_cnn_text_kernel(TB, T_out, K_max, D, F_pad)

    out = pl.pallas_call(
        kernel,
        out_shape=jax.ShapeDtypeStruct((B_pad, Cla_pad), jnp.float32),
        grid=(n_tiles,),
        in_specs=[
            pl.BlockSpec((TB, L_pad, D), lambda i: (i, 0, 0)),      # embeddings (batched)
            pl.BlockSpec((K_max, D, F_pad), lambda i: (0, 0, 0)),   # per-shift conv weights
            pl.BlockSpec((1, F_pad), lambda i: (0, 0)),             # conv bias (band-packed)
            pl.BlockSpec((T_out, F_pad), lambda i: (0, 0)),         # time-validity mask
            pl.BlockSpec((F_pad, Cla_pad), lambda i: (0, 0)),       # fc weight
            pl.BlockSpec((1, Cla_pad), lambda i: (0, 0)),           # fc bias
        ],
        out_specs=pl.BlockSpec((TB, Cla_pad), lambda i: (i, 0)),
        compiler_params=pltpu.CompilerParams(
            dimension_semantics=("parallel",),
            vmem_limit_bytes=32 * 1024 * 1024),
    )(emb, w_stack, conv_b, mask, fc_w, fc_b)

    return out[:B, :class_num]


# ------------------------------ reference (pure JAX) ----------------------------- #
def cnn_text_reference(tokens, embed_table, conv_ws, conv_bs, fc_w, fc_b, Ks):
    B, L = tokens.shape
    emb = jnp.take(embed_table, tokens, axis=0).astype(jnp.float32)    # (B, L, D)
    feats = []
    for idx, K in enumerate(Ks):
        T = L - K + 1
        xc = jnp.stack([emb[:, k:k + T, :] for k in range(K)], axis=2)  # (B, T, K, D)
        y = jnp.einsum("btkd,jkd->btj", xc, conv_ws[idx]) + conv_bs[idx][None, None, :]
        y = jnp.maximum(y, 0.0)
        feats.append(jnp.max(y, axis=1))                                 # (B, Knum)
    cat = jnp.concatenate(feats, axis=1)                                 # (B, len(Ks)*Knum)
    return cat @ fc_w.T + fc_b


# -------------------------------------- main ------------------------------------- #
if __name__ == "__main__":
    # args (small, consistent with the module's forward)
    Vocab = 50          # args.embed_num
    D = 32              # args.embed_dim
    Cla = 4             # args.class_num
    Knum = 8            # args.kernel_num
    Ks = [3, 4, 5]      # args.kernel_sizes
    B, L = 2, 16        # batch, sequence length

    key = jax.random.PRNGKey(0)
    keys = jax.random.split(key, 4 + 2 * len(Ks))

    tokens = jax.random.randint(keys[0], (B, L), 0, Vocab, dtype=jnp.int32)
    embed_table = 0.1 * jax.random.normal(keys[1], (Vocab, D), jnp.float32)

    # Conv2d(1, Knum, (K, D)) weights in torch layout with in_ch squeezed: (Knum, K, D).
    conv_ws, conv_bs = [], []
    for i, K in enumerate(Ks):
        conv_ws.append(0.1 * jax.random.normal(keys[2 + 2 * i], (Knum, K, D), jnp.float32))
        conv_bs.append(0.1 * jax.random.normal(keys[3 + 2 * i], (Knum,), jnp.float32))

    # Linear(len(Ks)*Knum, Cla) in torch layout: weight (Cla, in), bias (Cla,).
    fc_w = 0.1 * jax.random.normal(keys[-2], (Cla, len(Ks) * Knum), jnp.float32)
    fc_b = 0.1 * jax.random.normal(keys[-1], (Cla,), jnp.float32)

    # One-time packing (init-time); the jitted forward only sees pre-packed arrays.
    packed = pack_cnn_text_params(conv_ws, conv_bs, fc_w, fc_b, Ks, Knum, Cla, L)

    fwd = jax.jit(functools.partial(cnn_text_forward, class_num=Cla))
    logits = fwd(tokens, embed_table, packed)
    jax.block_until_ready(logits)

    ref = cnn_text_reference(tokens, embed_table, conv_ws, conv_bs, fc_w, fc_b, Ks)
    assert logits.shape == (B, Cla)
    # bf16 conv-matmul inputs (f32 accumulation, f32 FC) -> modest tolerance vs f32 ref.
    assert jnp.allclose(logits, ref, atol=2e-2, rtol=2e-2), "mismatch vs JAX reference"

    print("KERNEL_OK")
</pallas_src>

<mosaic_0001>
module attributes {stable_mosaic.version = 11 : i64} {
  func.func @kernel(%arg0: i32, %arg1: memref<8x20x32xbf16, #tpu.memory_space<vmem>>, %arg2: memref<5x32x128xbf16, #tpu.memory_space<vmem>>, %arg3: memref<1x128xf32, #tpu.memory_space<vmem>>, %arg4: memref<16x128xf32, #tpu.memory_space<vmem>>, %arg5: memref<128x128xf32, #tpu.memory_space<vmem>>, %arg6: memref<1x128xf32, #tpu.memory_space<vmem>>, %arg7: memref<8x128xf32, #tpu.memory_space<vmem>>) attributes {dimension_semantics = [#tpu.dimension_semantics<parallel>], iteration_bounds = array<i64: 1>, scalar_prefetch = 0 : i64, scratch_operands = 0 : i64, tpu.core_type = #tpu.core_type<tc>, window_params = [{transform_indices = @transform_0, window_bounds = array<i64: 8, 20, 32>}, {pipeline_mode = #tpu.pipeline_mode<synchronous>, transform_indices = @transform_1, window_bounds = array<i64: 5, 32, 128>}, {pipeline_mode = #tpu.pipeline_mode<synchronous>, transform_indices = @transform_2, window_bounds = array<i64: 1, 128>}, {pipeline_mode = #tpu.pipeline_mode<synchronous>, transform_indices = @transform_3, window_bounds = array<i64: 16, 128>}, {pipeline_mode = #tpu.pipeline_mode<synchronous>, transform_indices = @transform_4, window_bounds = array<i64: 128, 128>}, {pipeline_mode = #tpu.pipeline_mode<synchronous>, transform_indices = @transform_5, window_bounds = array<i64: 1, 128>}, {transform_indices = @transform_6, window_bounds = array<i64: 8, 128>}]} {
    %c0 = arith.constant 0 : index
    %c0_0 = arith.constant 0 : index
    %c0_1 = arith.constant 0 : index
    %0 = vector.load %arg1[%c0, %c0_0, %c0_1] : memref<8x20x32xbf16, #tpu.memory_space<vmem>>, vector<8x20x32xbf16>
    %cst = arith.constant 0.000000e+00 : f32
    %1 = vector.broadcast %cst : f32 to vector<128x128xf32>
    %2 = vector.extract_strided_slice %0 {offsets = [0, 0, 0], sizes = [8, 16, 32], strides = [1, 1, 1]} : vector<8x20x32xbf16> to vector<8x16x32xbf16>
    %3 = vector.shape_cast %2 : vector<8x16x32xbf16> to vector<128x32xbf16>
    %c0_2 = arith.constant 0 : index
    %c0_3 = arith.constant 0 : index
    %c0_4 = arith.constant 0 : index
    %4 = vector.load %arg2[%c0_2, %c0_3, %c0_4] : memref<5x32x128xbf16, #tpu.memory_space<vmem>>, vector<1x32x128xbf16>
    %5 = vector.shape_cast %4 : vector<1x32x128xbf16> to vector<32x128xbf16>
    %cst_5 = arith.constant dense<0.000000e+00> : vector<128x128xf32>
    %6 = tpu.matmul %3, %5, %cst_5 {dimension_numbers = #tpu.dot_dimension_numbers<[1], [0], [0], [1], [0, 0, 1, 1], [], []>} : vector<128x32xbf16>, vector<32x128xbf16>, vector<128x128xf32> -> vector<128x128xf32>
    %7 = arith.addf %1, %6 : vector<128x128xf32>
    %8 = vector.extract_strided_slice %0 {offsets = [0, 1, 0], sizes = [8, 16, 32], strides = [1, 1, 1]} : vector<8x20x32xbf16> to vector<8x16x32xbf16>
    %9 = vector.shape_cast %8 : vector<8x16x32xbf16> to vector<128x32xbf16>
    %c1 = arith.constant 1 : index
    %c0_6 = arith.constant 0 : index
    %c0_7 = arith.constant 0 : index
    %10 = vector.load %arg2[%c1, %c0_6, %c0_7] : memref<5x32x128xbf16, #tpu.memory_space<vmem>>, vector<1x32x128xbf16>
    %11 = vector.shape_cast %10 : vector<1x32x128xbf16> to vector<32x128xbf16>
    %cst_8 = arith.constant dense<0.000000e+00> : vector<128x128xf32>
    %12 = tpu.matmul %9, %11, %cst_8 {dimension_numbers = #tpu.dot_dimension_numbers<[1], [0], [0], [1], [0, 0, 1, 1], [], []>} : vector<128x32xbf16>, vector<32x128xbf16>, vector<128x128xf32> -> vector<128x128xf32>
    %13 = arith.addf %7, %12 : vector<128x128xf32>
    %14 = vector.extract_strided_slice %0 {offsets = [0, 2, 0], sizes = [8, 16, 32], strides = [1, 1, 1]} : vector<8x20x32xbf16> to vector<8x16x32xbf16>
    %15 = vector.shape_cast %14 : vector<8x16x32xbf16> to vector<128x32xbf16>
    %c2 = arith.constant 2 : index
    %c0_9 = arith.constant 0 : index
    %c0_10 = arith.constant 0 : index
    %16 = vector.load %arg2[%c2, %c0_9, %c0_10] : memref<5x32x128xbf16, #tpu.memory_space<vmem>>, vector<1x32x128xbf16>
    %17 = vector.shape_cast %16 : vector<1x32x128xbf16> to vector<32x128xbf16>
    %cst_11 = arith.constant dense<0.000000e+00> : vector<128x128xf32>
    %18 = tpu.matmul %15, %17, %cst_11 {dimension_numbers = #tpu.dot_dimension_numbers<[1], [0], [0], [1], [0, 0, 1, 1], [], []>} : vector<128x32xbf16>, vector<32x128xbf16>, vector<128x128xf32> -> vector<128x128xf32>
    %19 = arith.addf %13, %18 : vector<128x128xf32>
    %20 = vector.extract_strided_slice %0 {offsets = [0, 3, 0], sizes = [8, 16, 32], strides = [1, 1, 1]} : vector<8x20x32xbf16> to vector<8x16x32xbf16>
    %21 = vector.shape_cast %20 : vector<8x16x32xbf16> to vector<128x32xbf16>
    %c3 = arith.constant 3 : index
    %c0_12 = arith.constant 0 : index
    %c0_13 = arith.constant 0 : index
    %22 = vector.load %arg2[%c3, %c0_12, %c0_13] : memref<5x32x128xbf16, #tpu.memory_space<vmem>>, vector<1x32x128xbf16>
    %23 = vector.shape_cast %22 : vector<1x32x128xbf16> to vector<32x128xbf16>
    %cst_14 = arith.constant dense<0.000000e+00> : vector<128x128xf32>
    %24 = tpu.matmul %21, %23, %cst_14 {dimension_numbers = #tpu.dot_dimension_numbers<[1], [0], [0], [1], [0, 0, 1, 1], [], []>} : vector<128x32xbf16>, vector<32x128xbf16>, vector<128x128xf32> -> vector<128x128xf32>
    %25 = arith.addf %19, %24 : vector<128x128xf32>
    %26 = vector.extract_strided_slice %0 {offsets = [0, 4, 0], sizes = [8, 16, 32], strides = [1, 1, 1]} : vector<8x20x32xbf16> to vector<8x16x32xbf16>
    %27 = vector.shape_cast %26 : vector<8x16x32xbf16> to vector<128x32xbf16>
    %c4 = arith.constant 4 : index
    %c0_15 = arith.constant 0 : index
    %c0_16 = arith.constant 0 : index
    %28 = vector.load %arg2[%c4, %c0_15, %c0_16] : memref<5x32x128xbf16, #tpu.memory_space<vmem>>, vector<1x32x128xbf16>
    %29 = vector.shape_cast %28 : vector<1x32x128xbf16> to vector<32x128xbf16>
    %cst_17 = arith.constant dense<0.000000e+00> : vector<128x128xf32>
    %30 = tpu.matmul %27, %29, %cst_17 {dimension_numbers = #tpu.dot_dimension_numbers<[1], [0], [0], [1], [0, 0, 1, 1], [], []>} : vector<128x32xbf16>, vector<32x128xbf16>, vector<128x128xf32> -> vector<128x128xf32>
    %31 = arith.addf %25, %30 : vector<128x128xf32>
    %c0_18 = arith.constant 0 : index
    %c0_19 = arith.constant 0 : index
    %32 = vector.load %arg3[%c0_18, %c0_19] : memref<1x128xf32, #tpu.memory_space<vmem>>, vector<1x128xf32>
    %33 = vector.broadcast %32 : vector<1x128xf32> to vector<128x128xf32>
    %34 = arith.addf %31, %33 : vector<128x128xf32>
    %cst_20 = arith.constant 0.000000e+00 : f32
    %35 = vector.broadcast %cst_20 : f32 to vector<128x128xf32>
    %36 = arith.maximumf %34, %35 : vector<128x128xf32>
    %37 = vector.shape_cast %36 : vector<128x128xf32> to vector<8x16x128xf32>
    %c0_21 = arith.constant 0 : index
    %c0_22 = arith.constant 0 : index
    %38 = vector.load %arg4[%c0_21, %c0_22] : memref<16x128xf32, #tpu.memory_space<vmem>>, vector<16x128xf32>
    %39 = vector.shape_cast %38 : vector<16x128xf32> to vector<1x16x128xf32>
    %40 = vector.broadcast %39 : vector<1x16x128xf32> to vector<8x16x128xf32>
    %41 = arith.mulf %37, %40 : vector<8x16x128xf32>
    %cst_23 = arith.constant dense<0xFF800000> : vector<8x128xf32>
    %42 = vector.multi_reduction <maximumf>, %41, %cst_23 [1] : vector<8x16x128xf32> to vector<8x128xf32>
    %c0_24 = arith.constant 0 : index
    %c0_25 = arith.constant 0 : index
    %43 = vector.load %arg5[%c0_24, %c0_25] : memref<128x128xf32, #tpu.memory_space<vmem>>, vector<128x128xf32>
    %cst_26 = arith.constant dense<0.000000e+00> : vector<8x128xf32>
    %44 = tpu.matmul %42, %43, %cst_26 {dimension_numbers = #tpu.dot_dimension_numbers<[1], [0], [0], [1], [0, 0, 1, 1], [], []>} : vector<8x128xf32>, vector<128x128xf32>, vector<8x128xf32> -> vector<8x128xf32>
    %c0_27 = arith.constant 0 : index
    %c0_28 = arith.constant 0 : index
    %45 = vector.load %arg6[%c0_27, %c0_28] : memref<1x128xf32, #tpu.memory_space<vmem>>, vector<1x128xf32>
    %46 = vector.broadcast %45 : vector<1x128xf32> to vector<8x128xf32>
    %47 = arith.addf %44, %46 : vector<8x128xf32>
    %c0_29 = arith.constant 0 : index
    %c0_30 = arith.constant 0 : index
    %48 = vector.load %arg7[%c0_29, %c0_30] : memref<8x128xf32, #tpu.memory_space<vmem>>, vector<8x128xf32>
    tpu.vector_store %arg7[%c0_29, %c0_30], %47 {strides = array<i32>} : memref<8x128xf32, #tpu.memory_space<vmem>>, vector<8x128xf32>,
    return
  }
  func.func @transform_0(%arg0: i32) -> (i32, i32, i32) {
    %c0_i32 = arith.constant 0 : i32
    %c0_i32_0 = arith.constant 0 : i32
    %c0_i32_1 = arith.constant 0 : i32
    return %arg0, %c0_i32, %c0_i32_0 : i32, i32, i32
  }
  func.func @transform_1(%arg0: i32) -> (i32, i32, i32) {
    %c0_i32 = arith.constant 0 : i32
    %c0_i32_0 = arith.constant 0 : i32
    %c0_i32_1 = arith.constant 0 : i32
    %c0_i32_2 = arith.constant 0 : i32
    return %c0_i32, %c0_i32_0, %c0_i32_1 : i32, i32, i32
  }
  func.func @transform_2(%arg0: i32) -> (i32, i32) {
    %c0_i32 = arith.constant 0 : i32
    %c0_i32_0 = arith.constant 0 : i32
    %c0_i32_1 = arith.constant 0 : i32
    return %c0_i32, %c0_i32_0 : i32, i32
  }
  func.func @transform_3(%arg0: i32) -> (i32, i32) {
    %c0_i32 = arith.constant 0 : i32
    %c0_i32_0 = arith.constant 0 : i32
    %c0_i32_1 = arith.constant 0 : i32
    return %c0_i32, %c0_i32_0 : i32, i32
  }
  func.func @transform_4(%arg0: i32) -> (i32, i32) {
    %c0_i32 = arith.constant 0 : i32
    %c0_i32_0 = arith.constant 0 : i32
    %c0_i32_1 = arith.constant 0 : i32
    return %c0_i32, %c0_i32_0 : i32, i32
  }
  func.func @transform_5(%arg0: i32) -> (i32, i32) {
    %c0_i32 = arith.constant 0 : i32
    %c0_i32_0 = arith.constant 0 : i32
    %c0_i32_1 = arith.constant 0 : i32
    return %c0_i32, %c0_i32_0 : i32, i32
  }
  func.func @transform_6(%arg0: i32) -> (i32, i32) {
    %c0_i32 = arith.constant 0 : i32
    %c0_i32_0 = arith.constant 0 : i32
    return %arg0, %c0_i32 : i32, i32
  }
}

</mosaic_0001>

<llo_original>
// kernel: cnn_text_forward.1
$region0: #{cnn_text_forward.1}
  #allocation0 [shape = 'u32[]', space=smem, size = 0x4, offset = 0x4, fixed_abs, tag = 'smem constant byte address 0x4 - core index']
  #allocation1 [shape = 'u32[144,128]{1,0:T(1,128)}', space=vmem, size = 0x12000, scoped, tag = 'internal scratch']
  %s0 = inlined_call_operand.vmem [shape: bf16[8,20,32], index: 0, kind: input, shape index: {}]
  %s1 = inlined_call_operand.vmem [shape: bf16[5,32,128], index: 1, kind: input, shape index: {}]
  %s2 = inlined_call_operand.vmem [shape: f32[1,128], index: 2, kind: input, shape index: {}]
  %s3 = inlined_call_operand.vmem [shape: f32[16,128], index: 3, kind: input, shape index: {}]
  %s4 = inlined_call_operand.vmem [shape: f32[128,128], index: 4, kind: input, shape index: {}]
  %s5 = inlined_call_operand.vmem [shape: f32[1,128], index: 5, kind: input, shape index: {}]
  %s6 = inlined_call_operand.vmem [shape: f32[8,128], index: 6, kind: output, shape index: {}]
  %s7 = sld [smem:[#allocation0]]
  $region34: #{cnn_text_forward.1} parent=0
    _
  %s9 = ssub.s32 1, %s7
  %s10 = scalar_select 0, %s9, %s7
  // Predicated region
  $region2: #{cnn_text_forward.1} parent=0 // pred_check
    _
  $region3: #{cnn_text_forward.1} parent=0 // pred_check_branch
    %12 = sbr.rel (0) target = $region5
  $region4: #{cnn_text_forward.1} parent=0 // pred_region
    _
  $region5: #{cnn_text_forward.1} parent=0 // pred_fallthru
    _
  // Predicated region
  $region6: #{cnn_text_forward.1} parent=0 // pred_check
    _
  $region7: #{cnn_text_forward.1} parent=0 // pred_check_branch
    %14 = sbr.rel (0) target = $region9
  $region8: #{cnn_text_forward.1} parent=0 // pred_region
    _
  $region9: #{cnn_text_forward.1} parent=0 // pred_fallthru
    _
  // Predicated region
  $region10: #{cnn_text_forward.1} parent=0 // pred_check
    _
  $region11: #{cnn_text_forward.1} parent=0 // pred_check_branch
    %16 = sbr.rel (0) target = $region13
  $region12: #{cnn_text_forward.1} parent=0 // pred_region
    _
  $region13: #{cnn_text_forward.1} parent=0 // pred_fallthru
    _
  // Predicated region
  $region14: #{cnn_text_forward.1} parent=0 // pred_check
    _
  $region15: #{cnn_text_forward.1} parent=0 // pred_check_branch
    %18 = sbr.rel (0) target = $region17
  $region16: #{cnn_text_forward.1} parent=0 // pred_region
    _
  $region17: #{cnn_text_forward.1} parent=0 // pred_fallthru
    _
  // Predicated region
  $region18: #{cnn_text_forward.1} parent=0 // pred_check
    _
  $region19: #{cnn_text_forward.1} parent=0 // pred_check_branch
    %20 = sbr.rel (0) target = $region21
  $region20: #{cnn_text_forward.1} parent=0 // pred_region
    _
  $region21: #{cnn_text_forward.1} parent=0 // pred_fallthru
    _
  // Predicated region
  $region22: #{cnn_text_forward.1} parent=0 // pred_check
    _
  $region23: #{cnn_text_forward.1} parent=0 // pred_check_branch
    %22 = sbr.rel (0) target = $region25
  $region24: #{cnn_text_forward.1} parent=0 // pred_region
    _
  $region25: #{cnn_text_forward.1} parent=0 // pred_fallthru
    _
  %v24 = vld [vmem:[%s0] sm:$0xf]
  %v25 = vld [vmem:[%s0 + $0x4] sm:$0xf]
  %v26 = vld [vmem:[%s0 + $0x8] sm:$0x3]
  %v27 = vld [vmem:[%s0 + $0xc] sm:$0xf]
  %v28 = vld [vmem:[%s0 + $0x10] sm:$0xf]
  %v29 = vld [vmem:[%s0 + $0x14] sm:$0x3]
  %v30 = vld [vmem:[%s0 + $0x18] sm:$0xf]
  %v31 = vld [vmem:[%s0 + $0x1c] sm:$0xf]
  %v32 = vld [vmem:[%s0 + $0x20] sm:$0x3]
  %v33 = vld [vmem:[%s0 + $0x24] sm:$0xf]
  %v34 = vld [vmem:[%s0 + $0x28] sm:$0xf]
  %v35 = vld [vmem:[%s0 + $0x2c] sm:$0x3]
  %v36 = vld [vmem:[%s0 + $0x30] sm:$0xf]
  %v37 = vld [vmem:[%s0 + $0x34] sm:$0xf]
  %v38 = vld [vmem:[%s0 + $0x38] sm:$0x3]
  %v39 = vld [vmem:[%s0 + $0x3c] sm:$0xf]
  %v40 = vld [vmem:[%s0 + $0x40] sm:$0xf]
  %v41 = vld [vmem:[%s0 + $0x44] sm:$0x3]
  %v42 = vld [vmem:[%s0 + $0x48] sm:$0xf]
  %v43 = vld [vmem:[%s0 + $0x4c] sm:$0xf]
  %v44 = vld [vmem:[%s0 + $0x50] sm:$0x3]
  %v45 = vld [vmem:[%s0 + $0x54] sm:$0xf]
  %v46 = vld [vmem:[%s0 + $0x58] sm:$0xf]
  %v47 = vld [vmem:[%s0 + $0x5c] sm:$0x3]
  %v48 = vld [vmem:[%s1] sm:$0xf]
  %v49 = vld [vmem:[%s1 + $0x4] sm:$0xf]
  %v50 = vld [vmem:[%s1 + $0x8] sm:$0xf]
  %v51 = vld [vmem:[%s1 + $0xc] sm:$0xf]
  %vm52 = vsmask.f32 3328
  %vm53 = vsmask.f32 7440
  %vm54 = vmor %vm52, %vm53
  %v56 = vshrl.u32 %v24, 16
  %v58 = vrot.slane %v56, 4
  %v59 = vshll.u32 %v24, 16
  %v61 = vrot.slane %v59, 5
  %v62 = vor.u32 %v58, %v61
  %v63 = vrot.slane %v62, 4
  %v65 = vshll.u32 %v25, 16
  %v67 = vrot.slane %v65, 5
  %v68 = vsel %vm54, %v63, %v67
  %v69 = vshrl.u32 %v25, 16
  %v71 = vrot.slane %v69, 4
  %v72 = vor.u32 %v71, %v67
  %v73 = vrot.slane %v72, 4
  %v75 = vshll.u32 %v26, 16
  %v77 = vrot.slane %v75, 5
  %v78 = vsel %vm54, %v73, %v77
  %v80 = vshrl.u32 %v27, 16
  %v82 = vrot.slane %v80, 4
  %v83 = vshll.u32 %v27, 16
  %v85 = vrot.slane %v83, 5
  %v86 = vor.u32 %v82, %v85
  %v87 = vrot.slane %v86, 4
  %v89 = vshll.u32 %v28, 16
  %v91 = vrot.slane %v89, 5
  %v92 = vsel %vm54, %v87, %v91
  %v93 = vshrl.u32 %v28, 16
  %v95 = vrot.slane %v93, 4
  %v96 = vor.u32 %v95, %v91
  %v97 = vrot.slane %v96, 4
  %v99 = vshll.u32 %v29, 16
  %v101 = vrot.slane %v99, 5
  %v102 = vsel %vm54, %v97, %v101
  %v104 = vshrl.u32 %v30, 16
  %v106 = vrot.slane %v104, 4
  %v107 = vshll.u32 %v30, 16
  %v109 = vrot.slane %v107, 5
  %v110 = vor.u32 %v106, %v109
  %v111 = vrot.slane %v110, 4
  %v113 = vshll.u32 %v31, 16
  %v115 = vrot.slane %v113, 5
  %v116 = vsel %vm54, %v111, %v115
  %v117 = vshrl.u32 %v31, 16
  %v119 = vrot.slane %v117, 4
  %v120 = vor.u32 %v119, %v115
  %v121 = vrot.slane %v120, 4
  %v123 = vshll.u32 %v32, 16
  %v125 = vrot.slane %v123, 5
  %v126 = vsel %vm54, %v121, %v125
  %v128 = vshrl.u32 %v33, 16
  %v130 = vrot.slane %v128, 4
  %v131 = vshll.u32 %v33, 16
  %v133 = vrot.slane %v131, 5
  %v134 = vor.u32 %v130, %v133
  %v135 = vrot.slane %v134, 4
  %v137 = vshll.u32 %v34, 16
  %v139 = vrot.slane %v137, 5
  %v140 = vsel %vm54, %v135, %v139
  %v141 = vshrl.u32 %v34, 16
  %v143 = vrot.slane %v141, 4
  %v144 = vor.u32 %v143, %v139
  %v145 = vrot.slane %v144, 4
  %v147 = vshll.u32 %v35, 16
  %v149 = vrot.slane %v147, 5
  %v150 = vsel %vm54, %v145, %v149
  %v152 = vshrl.u32 %v36, 16
  %v154 = vrot.slane %v152, 4
  %v155 = vshll.u32 %v36, 16
  %v157 = vrot.slane %v155, 5
  %v158 = vor.u32 %v154, %v157
  %v159 = vrot.slane %v158, 4
  %v161 = vshll.u32 %v37, 16
  %v163 = vrot.slane %v161, 5
  %v164 = vsel %vm54, %v159, %v163
  %v165 = vshrl.u32 %v37, 16
  %v167 = vrot.slane %v165, 4
  %v168 = vor.u32 %v167, %v163
  %v169 = vrot.slane %v168, 4
  %v171 = vshll.u32 %v38, 16
  %v173 = vrot.slane %v171, 5
  %v174 = vsel %vm54, %v169, %v173
  %v176 = vshrl.u32 %v39, 16
  %v178 = vrot.slane %v176, 4
  %v179 = vshll.u32 %v39, 16
  %v181 = vrot.slane %v179, 5
  %v182 = vor.u32 %v178, %v181
  %v183 = vrot.slane %v182, 4
  %v185 = vshll.u32 %v40, 16
  %v187 = vrot.slane %v185, 5
  %v188 = vsel %vm54, %v183, %v187
  %v189 = vshrl.u32 %v40, 16
  %v191 = vrot.slane %v189, 4
  %v192 = vor.u32 %v191, %v187
  %v193 = vrot.slane %v192, 4
  %v195 = vshll.u32 %v41, 16
  %v197 = vrot.slane %v195, 5
  %v198 = vsel %vm54, %v193, %v197
  %v200 = vshrl.u32 %v42, 16
  %v202 = vrot.slane %v200, 4
  %v203 = vshll.u32 %v42, 16
  %v205 = vrot.slane %v203, 5
  %v206 = vor.u32 %v202, %v205
  %v207 = vrot.slane %v206, 4
  %v209 = vshll.u32 %v43, 16
  %v211 = vrot.slane %v209, 5
  %v212 = vsel %vm54, %v207, %v211
  %v213 = vshrl.u32 %v43, 16
  %v215 = vrot.slane %v213, 4
  %v216 = vor.u32 %v215, %v211
  %v217 = vrot.slane %v216, 4
  %v219 = vshll.u32 %v44, 16
  %v221 = vrot.slane %v219, 5
  %v222 = vsel %vm54, %v217, %v221
  %v224 = vshrl.u32 %v45, 16
  %v226 = vrot.slane %v224, 4
  %v227 = vshll.u32 %v45, 16
  %v229 = vrot.slane %v227, 5
  %v230 = vor.u32 %v226, %v229
  %v231 = vrot.slane %v230, 4
  %v233 = vshll.u32 %v46, 16
  %v235 = vrot.slane %v233, 5
  %v236 = vsel %vm54, %v231, %v235
  %v237 = vshrl.u32 %v46, 16
  %v239 = vrot.slane %v237, 4
  %v240 = vor.u32 %v239, %v235
  %v241 = vrot.slane %v240, 4
  %v243 = vshll.u32 %v47, 16
  %v245 = vrot.slane %v243, 5
  %v246 = vsel %vm54, %v241, %v245
  %s247 = scalar_lea.vmem %s1, 16
  %v248 = vld [vmem:[%s247] sm:$0xf]
  %v249 = vld [vmem:[%s247 + $0x4] sm:$0xf]
  %v250 = vld [vmem:[%s247 + $0x8] sm:$0xf]
  %v251 = vld [vmem:[%s247 + $0xc] sm:$0xf]
  %v252 = vunpack.c.l.b16 %v68
  %v253 = vunpack.c.l.b16 %v78
  %v254 = vunpack.c.l.b16 %v92
  %v255 = vunpack.c.l.b16 %v102
  %v256 = vunpack.c.l.b16 %v116
  %v257 = vunpack.c.l.b16 %v126
  %v258 = vunpack.c.l.b16 %v140
  %v259 = vunpack.c.l.b16 %v150
  %v260 = vunpack.c.l.b16 %v164
  %v261 = vunpack.c.l.b16 %v174
  %v262 = vunpack.c.l.b16 %v188
  %v263 = vunpack.c.l.b16 %v198
  %v264 = vunpack.c.l.b16 %v212
  %v265 = vunpack.c.l.b16 %v222
  %v266 = vunpack.c.l.b16 %v236
  %v267 = vunpack.c.l.b16 %v246
  %v268 = vpack.c.b16 %v253, %v252
  %v269 = vpack.c.b16 %v255, %v254
  %v270 = vpack.c.b16 %v257, %v256
  %v271 = vpack.c.b16 %v259, %v258
  %v272 = vpack.c.b16 %v261, %v260
  %v273 = vpack.c.b16 %v263, %v262
  %v274 = vpack.c.b16 %v265, %v264
  %v275 = vpack.c.b16 %v267, %v266
  %v280 = vunpack.c.l.b16 %v248
  %v281 = vunpack.c.l.b16 %v249
  %v282 = vunpack.c.l.b16 %v250
  %v283 = vunpack.c.l.b16 %v251
  %v284 = vpack.c.b16 %v281, %v280
  %v285 = vpack.c.b16 %v283, %v282
  %vm288 = vcmask 261120
  %v290 = vsel %vm288, %v268, 0
  %v293 = vsel %vm288, %v269, 0
  %v296 = vsel %vm288, %v270, 0
  %v299 = vsel %vm288, %v271, 0
  %v302 = vsel %vm288, %v272, 0
  %v305 = vsel %vm288, %v273, 0
  %v308 = vsel %vm288, %v274, 0
  %v311 = vsel %vm288, %v275, 0
  %313 = vmatprep.subr.bf16.mxu0 0
  %314 = vmatpush1.bf16.msra.mxu0 0
  %315 = vmatprep.subr.bf16.mxu0 0
  %316 = vmatpush1.bf16.msra.mxu0 0
  %317 = vmatprep.subr.bf16.mxu0 0
  %318 = vmatpush1.bf16.msra.mxu0 0
  %319 = vmatprep.subr.bf16.mxu0 0
  %320 = vmatpush1.bf16.msra.mxu0 0
  %321 = vmatprep.subr.bf16.mxu0 0
  %322 = vmatpush1.bf16.msra.mxu0 0
  %323 = vmatprep.subr.bf16.mxu0 0
  %324 = vmatpush1.bf16.msra.mxu0 0
  %325 = vmatprep.subr.bf16.mxu0 0
  %326 = vmatpush1.bf16.msra.mxu0 %v285
  %327 = vmatprep.subr.bf16.mxu0 0
  %328 = vmatpush1.bf16.msra.mxu0 %v284
  %329 = vmatprep.subr.bf16.mxu0 0
  %330 = vmatpush2.bf16.msra.mxu0 0
  %331 = vmatprep.subr.bf16.mxu0 0
  %332 = vmatpush2.bf16.msra.mxu0 0
  %333 = vmatprep.subr.bf16.mxu0 0
  %334 = vmatpush2.bf16.msra.mxu0 0
  %335 = vmatprep.subr.bf16.mxu0 0
  %336 = vmatpush2.bf16.msra.mxu0 0
  %337 = vmatprep.subr.bf16.mxu0 0
  %338 = vmatpush2.bf16.msra.mxu0 0
  %339 = vmatprep.subr.bf16.mxu0 0
  %340 = vmatpush2.bf16.msra.mxu0 0
  %341 = vmatprep.subr.bf16.mxu0 0
  %342 = vmatpush2.bf16.msra.mxu0 0
  %343 = vmatprep.subr.bf16.mxu0 0
  %344 = vmatpush2.bf16.msra.mxu0 0
  %345 = vmatprep.mubr.bf16.mxu0 0
  %346 = vmatmul.mubr.bf16.gmra.mxu0 %v290
  %v347 = vpop.f32.mrf.mxu0
  %v348 = vadd.f32 0.0, %v347
  %v349 = vpop.f32.mrf.mxu0
  %v350 = vpop.f32.mrf.mxu0
  %v351 = vadd.f32 0.0, %v350
  %v352 = vpop.f32.mrf.mxu0
  %353 = vmatprep.mubr.bf16.mxu0 0
  %354 = vmatmul.mubr.bf16.gmra.mxu0 %v293
  %v355 = vpop.f32.mrf.mxu0
  %v356 = vadd.f32 0.0, %v355
  %v357 = vpop.f32.mrf.mxu0
  %v358 = vpop.f32.mrf.mxu0
  %v359 = vadd.f32 0.0, %v358
  %v360 = vpop.f32.mrf.mxu0
  %361 = vmatprep.mubr.bf16.mxu0 0
  %362 = vmatmul.mubr.bf16.gmra.mxu0 %v296
  %v363 = vpop.f32.mrf.mxu0
  %v364 = vadd.f32 0.0, %v363
  %v365 = vpop.f32.mrf.mxu0
  %v366 = vpop.f32.mrf.mxu0
  %v367 = vadd.f32 0.0, %v366
  %v368 = vpop.f32.mrf.mxu0
  %369 = vmatprep.mubr.bf16.mxu0 0
  %370 = vmatmul.mubr.bf16.gmra.mxu0 %v299
  %v371 = vpop.f32.mrf.mxu0
  %v372 = vadd.f32 0.0, %v371
  %v373 = vpop.f32.mrf.mxu0
  %v374 = vpop.f32.mrf.mxu0
  %v375 = vadd.f32 0.0, %v374
  %v376 = vpop.f32.mrf.mxu0
  %377 = vmatprep.mubr.bf16.mxu0 0
  %378 = vmatmul.mubr.bf16.gmra.mxu0 %v302
  %v379 = vpop.f32.mrf.mxu0
  %v380 = vadd.f32 0.0, %v379
  %v381 = vpop.f32.mrf.mxu0
  %v382 = vpop.f32.mrf.mxu0
  %v383 = vadd.f32 0.0, %v382
  %v384 = vpop.f32.mrf.mxu0
  %385 = vmatprep.mubr.bf16.mxu0 0
  %386 = vmatmul.mubr.bf16.gmra.mxu0 %v305
  %v387 = vpop.f32.mrf.mxu0
  %v388 = vadd.f32 0.0, %v387
  %v389 = vpop.f32.mrf.mxu0
  %v390 = vpop.f32.mrf.mxu0
  %v391 = vadd.f32 0.0, %v390
  %v392 = vpop.f32.mrf.mxu0
  %393 = vmatprep.mubr.bf16.mxu0 0
  %394 = vmatmul.mubr.bf16.gmra.mxu0 %v308
  %v395 = vpop.f32.mrf.mxu0
  %v396 = vadd.f32 0.0, %v395
  %v397 = vpop.f32.mrf.mxu0
  %v398 = vpop.f32.mrf.mxu0
  %v399 = vadd.f32 0.0, %v398
  %v400 = vpop.f32.mrf.mxu0
  %401 = vmatprep.mubr.bf16.mxu0 0
  %402 = vmatmul.mubr.bf16.gmra.mxu0 %v311
  %v403 = vpop.f32.mrf.mxu0
  %v404 = vadd.f32 0.0, %v403
  %v405 = vpop.f32.mrf.mxu0
  %v406 = vpop.f32.mrf.mxu0
  %v407 = vadd.f32 0.0, %v406
  %v408 = vpop.f32.mrf.mxu0
  %409 = vdwg.mxu0
  %v426 = vunpack.c.l.b16 %v24
  %v427 = vunpack.c.l.b16 %v25
  %v428 = vunpack.c.l.b16 %v27
  %v429 = vunpack.c.l.b16 %v28
  %v430 = vunpack.c.l.b16 %v30
  %v431 = vunpack.c.l.b16 %v31
  %v432 = vunpack.c.l.b16 %v33
  %v433 = vunpack.c.l.b16 %v34
  %v434 = vunpack.c.l.b16 %v36
  %v435 = vunpack.c.l.b16 %v37
  %v436 = vunpack.c.l.b16 %v39
  %v437 = vunpack.c.l.b16 %v40
  %v438 = vunpack.c.l.b16 %v42
  %v439 = vunpack.c.l.b16 %v43
  %v440 = vunpack.c.l.b16 %v45
  %v441 = vunpack.c.l.b16 %v46
  %v442 = vpack.c.b16 %v427, %v426
  %v443 = vpack.c.b16 %v429, %v428
  %v444 = vpack.c.b16 %v431, %v430
  %v445 = vpack.c.b16 %v433, %v432
  %v446 = vpack.c.b16 %v435, %v434
  %v447 = vpack.c.b16 %v437, %v436
  %v448 = vpack.c.b16 %v439, %v438
  %v449 = vpack.c.b16 %v441, %v440
  %v454 = vunpack.c.l.b16 %v48
  %v455 = vunpack.c.l.b16 %v49
  %v456 = vunpack.c.l.b16 %v50
  %v457 = vunpack.c.l.b16 %v51
  %v458 = vpack.c.b16 %v455, %v454
  %v459 = vpack.c.b16 %v457, %v456
  %v463 = vsel %vm288, %v442, 0
  %v466 = vsel %vm288, %v443, 0
  %v469 = vsel %vm288, %v444, 0
  %v472 = vsel %vm288, %v445, 0
  %v475 = vsel %vm288, %v446, 0
  %v478 = vsel %vm288, %v447, 0
  %v481 = vsel %vm288, %v448, 0
  %v484 = vsel %vm288, %v449, 0
  %486 = vmatprep.subr.bf16.mxu0 0
  %487 = vmatpush1.bf16.msra.mxu0 0
  %488 = vmatprep.subr.bf16.mxu0 0
  %489 = vmatpush1.bf16.msra.mxu0 0
  %490 = vmatprep.subr.bf16.mxu0 0
  %491 = vmatpush1.bf16.msra.mxu0 0
  %492 = vmatprep.subr.bf16.mxu0 0
  %493 = vmatpush1.bf16.msra.mxu0 0
  %494 = vmatprep.subr.bf16.mxu0 0
  %495 = vmatpush1.bf16.msra.mxu0 0
  %496 = vmatprep.subr.bf16.mxu0 0
  %497 = vmatpush1.bf16.msra.mxu0 0
  %498 = vmatprep.subr.bf16.mxu0 0
  %499 = vmatpush1.bf16.msra.mxu0 %v459
  %500 = vmatprep.subr.bf16.mxu0 0
  %501 = vmatpush1.bf16.msra.mxu0 %v458
  %502 = vmatprep.subr.bf16.mxu0 0
  %503 = vmatpush2.bf16.msra.mxu0 0
  %504 = vmatprep.subr.bf16.mxu0 0
  %505 = vmatpush2.bf16.msra.mxu0 0
  %506 = vmatprep.subr.bf16.mxu0 0
  %507 = vmatpush2.bf16.msra.mxu0 0
  %508 = vmatprep.subr.bf16.mxu0 0
  %509 = vmatpush2.bf16.msra.mxu0 0
  %510 = vmatprep.subr.bf16.mxu0 0
  %511 = vmatpush2.bf16.msra.mxu0 0
  %512 = vmatprep.subr.bf16.mxu0 0
  %513 = vmatpush2.bf16.msra.mxu0 0
  %514 = vmatprep.subr.bf16.mxu0 0
  %515 = vmatpush2.bf16.msra.mxu0 0
  %516 = vmatprep.subr.bf16.mxu0 0
  %517 = vmatpush2.bf16.msra.mxu0 0
  %518 = vmatprep.mubr.bf16.mxu0 0
  %519 = vmatmul.mubr.bf16.gmra.mxu0 %v463
  %v520 = vpop.f32.mrf.mxu0
  %v521 = vadd.f32 %v348, %v520
  %v522 = vpop.f32.mrf.mxu0
  %v523 = vpop.f32.mrf.mxu0
  %v524 = vadd.f32 %v351, %v523
  %v525 = vpop.f32.mrf.mxu0
  %526 = vmatprep.mubr.bf16.mxu0 0
  %527 = vmatmul.mubr.bf16.gmra.mxu0 %v466
  %v528 = vpop.f32.mrf.mxu0
  %v529 = vadd.f32 %v356, %v528
  %v530 = vpop.f32.mrf.mxu0
  %v531 = vpop.f32.mrf.mxu0
  %v532 = vadd.f32 %v359, %v531
  %v533 = vpop.f32.mrf.mxu0
  %534 = vmatprep.mubr.bf16.mxu0 0
  %535 = vmatmul.mubr.bf16.gmra.mxu0 %v469
  %v536 = vpop.f32.mrf.mxu0
  %v537 = vadd.f32 %v364, %v536
  %v538 = vpop.f32.mrf.mxu0
  %v539 = vpop.f32.mrf.mxu0
  %v540 = vadd.f32 %v367, %v539
  %v541 = vpop.f32.mrf.mxu0
  %542 = vmatprep.mubr.bf16.mxu0 0
  %543 = vmatmul.mubr.bf16.gmra.mxu0 %v472
  %v544 = vpop.f32.mrf.mxu0
  %v545 = vadd.f32 %v372, %v544
  %v546 = vpop.f32.mrf.mxu0
  %v547 = vpop.f32.mrf.mxu0
  %v548 = vadd.f32 %v375, %v547
  %v549 = vpop.f32.mrf.mxu0
  %550 = vmatprep.mubr.bf16.mxu0 0
  %551 = vmatmul.mubr.bf16.gmra.mxu0 %v475
  %v552 = vpop.f32.mrf.mxu0
  %v553 = vadd.f32 %v380, %v552
  %v554 = vpop.f32.mrf.mxu0
  %v555 = vpop.f32.mrf.mxu0
  %v556 = vadd.f32 %v383, %v555
  %v557 = vpop.f32.mrf.mxu0
  %558 = vmatprep.mubr.bf16.mxu0 0
  %559 = vmatmul.mubr.bf16.gmra.mxu0 %v478
  %v560 = vpop.f32.mrf.mxu0
  %v561 = vadd.f32 %v388, %v560
  %v562 = vpop.f32.mrf.mxu0
  %v563 = vpop.f32.mrf.mxu0
  %v564 = vadd.f32 %v391, %v563
  %v565 = vpop.f32.mrf.mxu0
  %566 = vmatprep.mubr.bf16.mxu0 0
  %567 = vmatmul.mubr.bf16.gmra.mxu0 %v481
  %v568 = vpop.f32.mrf.mxu0
  %v569 = vadd.f32 %v396, %v568
  %v570 = vpop.f32.mrf.mxu0
  %v571 = vpop.f32.mrf.mxu0
  %v572 = vadd.f32 %v399, %v571
  %v573 = vpop.f32.mrf.mxu0
  %574 = vmatprep.mubr.bf16.mxu0 0
  %575 = vmatmul.mubr.bf16.gmra.mxu0 %v484
  %v576 = vpop.f32.mrf.mxu0
  %v577 = vadd.f32 %v404, %v576
  %v578 = vpop.f32.mrf.mxu0
  %v579 = vpop.f32.mrf.mxu0
  %v580 = vadd.f32 %v407, %v579
  %v581 = vpop.f32.mrf.mxu0
  %582 = vdwg.mxu0
  %vm591 = vcmask 1042432
  %vm592 = vcmask 1046532
  %vm593 = vmor %vm591, %vm592
  %v594 = vrot.slane %v24, 5
  %v595 = vrot.slane %v594, 4
  %v596 = vrot.slane %v25, 5
  %v597 = vsel %vm593, %v595, %v596
  %v598 = vrot.slane %v596, 4
  %v599 = vrot.slane %v26, 5
  %v600 = vsel %vm593, %v598, %v599
  %v601 = vrot.slane %v27, 5
  %v602 = vrot.slane %v601, 4
  %v603 = vrot.slane %v28, 5
  %v604 = vsel %vm593, %v602, %v603
  %v605 = vrot.slane %v603, 4
  %v606 = vrot.slane %v29, 5
  %v607 = vsel %vm593, %v605, %v606
  %v608 = vrot.slane %v30, 5
  %v609 = vrot.slane %v608, 4
  %v610 = vrot.slane %v31, 5
  %v611 = vsel %vm593, %v609, %v610
  %v612 = vrot.slane %v610, 4
  %v613 = vrot.slane %v32, 5
  %v614 = vsel %vm593, %v612, %v613
  %v615 = vrot.slane %v33, 5
  %v616 = vrot.slane %v615, 4
  %v617 = vrot.slane %v34, 5
  %v618 = vsel %vm593, %v616, %v617
  %v619 = vrot.slane %v617, 4
  %v620 = vrot.slane %v35, 5
  %v621 = vsel %vm593, %v619, %v620
  %v622 = vrot.slane %v36, 5
  %v623 = vrot.slane %v622, 4
  %v624 = vrot.slane %v37, 5
  %v625 = vsel %vm593, %v623, %v624
  %v626 = vrot.slane %v624, 4
  %v627 = vrot.slane %v38, 5
  %v628 = vsel %vm593, %v626, %v627
  %v629 = vrot.slane %v39, 5
  %v630 = vrot.slane %v629, 4
  %v631 = vrot.slane %v40, 5
  %v632 = vsel %vm593, %v630, %v631
  %v633 = vrot.slane %v631, 4
  %v634 = vrot.slane %v41, 5
  %v635 = vsel %vm593, %v633, %v634
  %v636 = vrot.slane %v42, 5
  %v637 = vrot.slane %v636, 4
  %v638 = vrot.slane %v43, 5
  %v639 = vsel %vm593, %v637, %v638
  %v640 = vrot.slane %v638, 4
  %v641 = vrot.slane %v44, 5
  %v642 = vsel %vm593, %v640, %v641
  %v643 = vrot.slane %v45, 5
  %v644 = vrot.slane %v643, 4
  %v645 = vrot.slane %v46, 5
  %v646 = vsel %vm593, %v644, %v645
  %v647 = vrot.slane %v645, 4
  %v648 = vrot.slane %v47, 5
  %v649 = vsel %vm593, %v647, %v648
  %s650 = scalar_lea.vmem %s1, 32
  %v651 = vld [vmem:[%s650] sm:$0xf]
  %v652 = vld [vmem:[%s650 + $0x4] sm:$0xf]
  %v653 = vld [vmem:[%s650 + $0x8] sm:$0xf]
  %v654 = vld [vmem:[%s650 + $0xc] sm:$0xf]
  %v655 = vunpack.c.l.b16 %v597
  %v656 = vunpack.c.l.b16 %v600
  %v657 = vunpack.c.l.b16 %v604
  %v658 = vunpack.c.l.b16 %v607
  %v659 = vunpack.c.l.b16 %v611
  %v660 = vunpack.c.l.b16 %v614
  %v661 = vunpack.c.l.b16 %v618
  %v662 = vunpack.c.l.b16 %v621
  %v663 = vunpack.c.l.b16 %v625
  %v664 = vunpack.c.l.b16 %v628
  %v665 = vunpack.c.l.b16 %v632
  %v666 = vunpack.c.l.b16 %v635
  %v667 = vunpack.c.l.b16 %v639
  %v668 = vunpack.c.l.b16 %v642
  %v669 = vunpack.c.l.b16 %v646
  %v670 = vunpack.c.l.b16 %v649
  %v671 = vpack.c.b16 %v656, %v655
  %v672 = vpack.c.b16 %v658, %v657
  %v673 = vpack.c.b16 %v660, %v659
  %v674 = vpack.c.b16 %v662, %v661
  %v675 = vpack.c.b16 %v664, %v663
  %v676 = vpack.c.b16 %v666, %v665
  %v677 = vpack.c.b16 %v668, %v667
  %v678 = vpack.c.b16 %v670, %v669
  %v683 = vunpack.c.l.b16 %v651
  %v684 = vunpack.c.l.b16 %v652
  %v685 = vunpack.c.l.b16 %v653
  %v686 = vunpack.c.l.b16 %v654
  %v687 = vpack.c.b16 %v684, %v683
  %v688 = vpack.c.b16 %v686, %v685
  %v692 = vsel %vm288, %v671, 0
  %v695 = vsel %vm288, %v672, 0
  %v698 = vsel %vm288, %v673, 0
  %v701 = vsel %vm288, %v674, 0
  %v704 = vsel %vm288, %v675, 0
  %v707 = vsel %vm288, %v676, 0
  %v710 = vsel %vm288, %v677, 0
  %v713 = vsel %vm288, %v678, 0
  %715 = vmatprep.subr.bf16.mxu0 0
  %716 = vmatpush1.bf16.msra.mxu0 0
  %717 = vmatprep.subr.bf16.mxu0 0
  %718 = vmatpush1.bf16.msra.mxu0 0
  %719 = vmatprep.subr.bf16.mxu0 0
  %720 = vmatpush1.bf16.msra.mxu0 0
  %721 = vmatprep.subr.bf16.mxu0 0
  %722 = vmatpush1.bf16.msra.mxu0 0
  %723 = vmatprep.subr.bf16.mxu0 0
  %724 = vmatpush1.bf16.msra.mxu0 0
  %725 = vmatprep.subr.bf16.mxu0 0
  %726 = vmatpush1.bf16.msra.mxu0 0
  %727 = vmatprep.subr.bf16.mxu0 0
  %728 = vmatpush1.bf16.msra.mxu0 %v688
  %729 = vmatprep.subr.bf16.mxu0 0
  %730 = vmatpush1.bf16.msra.mxu0 %v687
  %731 = vmatprep.subr.bf16.mxu0 0
  %732 = vmatpush2.bf16.msra.mxu0 0
  %733 = vmatprep.subr.bf16.mxu0 0
  %734 = vmatpush2.bf16.msra.mxu0 0
  %735 = vmatprep.subr.bf16.mxu0 0
  %736 = vmatpush2.bf16.msra.mxu0 0
  %737 = vmatprep.subr.bf16.mxu0 0
  %738 = vmatpush2.bf16.msra.mxu0 0
  %739 = vmatprep.subr.bf16.mxu0 0
  %740 = vmatpush2.bf16.msra.mxu0 0
  %741 = vmatprep.subr.bf16.mxu0 0
  %742 = vmatpush2.bf16.msra.mxu0 0
  %743 = vmatprep.subr.bf16.mxu0 0
  %744 = vmatpush2.bf16.msra.mxu0 0
  %745 = vmatprep.subr.bf16.mxu0 0
  %746 = vmatpush2.bf16.msra.mxu0 0
  %747 = vmatprep.mubr.bf16.mxu0 0
  %748 = vmatmul.mubr.bf16.gmra.mxu0 %v692
  %v749 = vpop.f32.mrf.mxu0
  %v750 = vadd.f32 0.0, %v749
  %v751 = vpop.f32.mrf.mxu0
  %v752 = vpop.f32.mrf.mxu0
  %v753 = vadd.f32 0.0, %v752
  %v754 = vpop.f32.mrf.mxu0
  %755 = vmatprep.mubr.bf16.mxu0 0
  %756 = vmatmul.mubr.bf16.gmra.mxu0 %v695
  %v757 = vpop.f32.mrf.mxu0
  %v758 = vadd.f32 0.0, %v757
  %v759 = vpop.f32.mrf.mxu0
  %v760 = vpop.f32.mrf.mxu0
  %v761 = vadd.f32 0.0, %v760
  %v762 = vpop.f32.mrf.mxu0
  %763 = vmatprep.mubr.bf16.mxu0 0
  %764 = vmatmul.mubr.bf16.gmra.mxu0 %v698
  %v765 = vpop.f32.mrf.mxu0
  %v766 = vadd.f32 0.0, %v765
  %v767 = vpop.f32.mrf.mxu0
  %v768 = vpop.f32.mrf.mxu0
  %v769 = vadd.f32 0.0, %v768
  %v770 = vpop.f32.mrf.mxu0
  %771 = vmatprep.mubr.bf16.mxu0 0
  %772 = vmatmul.mubr.bf16.gmra.mxu0 %v701
  %v773 = vpop.f32.mrf.mxu0
  %v774 = vadd.f32 0.0, %v773
  %v775 = vpop.f32.mrf.mxu0
  %v776 = vpop.f32.mrf.mxu0
  %v777 = vadd.f32 0.0, %v776
  %v778 = vpop.f32.mrf.mxu0
  %779 = vmatprep.mubr.bf16.mxu0 0
  %780 = vmatmul.mubr.bf16.gmra.mxu0 %v704
  %v781 = vpop.f32.mrf.mxu0
  %v782 = vadd.f32 0.0, %v781
  %v783 = vpop.f32.mrf.mxu0
  %v784 = vpop.f32.mrf.mxu0
  %v785 = vadd.f32 0.0, %v784
  %v786 = vpop.f32.mrf.mxu0
  %787 = vmatprep.mubr.bf16.mxu0 0
  %788 = vmatmul.mubr.bf16.gmra.mxu0 %v707
  %v789 = vpop.f32.mrf.mxu0
  %v790 = vadd.f32 0.0, %v789
  %v791 = vpop.f32.mrf.mxu0
  %v792 = vpop.f32.mrf.mxu0
  %v793 = vadd.f32 0.0, %v792
  %v794 = vpop.f32.mrf.mxu0
  %795 = vmatprep.mubr.bf16.mxu0 0
  %796 = vmatmul.mubr.bf16.gmra.mxu0 %v710
  %v797 = vpop.f32.mrf.mxu0
  %v798 = vadd.f32 0.0, %v797
  %v799 = vpop.f32.mrf.mxu0
  %v800 = vpop.f32.mrf.mxu0
  %v801 = vadd.f32 0.0, %v800
  %v802 = vpop.f32.mrf.mxu0
  %803 = vmatprep.mubr.bf16.mxu0 0
  %804 = vmatmul.mubr.bf16.gmra.mxu0 %v713
  %v805 = vpop.f32.mrf.mxu0
  %v806 = vadd.f32 0.0, %v805
  %v807 = vpop.f32.mrf.mxu0
  %v808 = vpop.f32.mrf.mxu0
  %v809 = vadd.f32 0.0, %v808
  %v810 = vpop.f32.mrf.mxu0
  %811 = vdwg.mxu0
  %v812 = vadd.f32 %v521, %v750
  %v813 = vadd.f32 %v524, %v753
  %v814 = vadd.f32 %v529, %v758
  %v815 = vadd.f32 %v532, %v761
  %v816 = vadd.f32 %v537, %v766
  %v817 = vadd.f32 %v540, %v769
  %v818 = vadd.f32 %v545, %v774
  %v819 = vadd.f32 %v548, %v777
  %v820 = vadd.f32 %v553, %v782
  %v821 = vadd.f32 %v556, %v785
  %v822 = vadd.f32 %v561, %v790
  %v823 = vadd.f32 %v564, %v793
  %v824 = vadd.f32 %v569, %v798
  %v825 = vadd.f32 %v572, %v801
  %v826 = vadd.f32 %v577, %v806
  %v827 = vadd.f32 %v580, %v809
  %vm828 = vsmask.f32 2304
  %vm829 = vsmask.f32 6416
  %vm830 = vmor %vm828, %vm829
  %v831 = vrot.slane %v56, 5
  %v832 = vrot.slane %v59, 6
  %v833 = vor.u32 %v831, %v832
  %v834 = vrot.slane %v833, 4
  %v835 = vrot.slane %v69, 5
  %v836 = vrot.slane %v65, 6
  %v837 = vor.u32 %v835, %v836
  %v838 = vsel %vm830, %v834, %v837
  %v839 = vrot.slane %v837, 4
  %v840 = vshrl.u32 %v26, 16
  %v842 = vrot.slane %v840, 5
  %v843 = vrot.slane %v75, 6
  %v844 = vor.u32 %v842, %v843
  %v845 = vsel %vm830, %v839, %v844
  %v846 = vrot.slane %v80, 5
  %v847 = vrot.slane %v83, 6
  %v848 = vor.u32 %v846, %v847
  %v849 = vrot.slane %v848, 4
  %v850 = vrot.slane %v93, 5
  %v851 = vrot.slane %v89, 6
  %v852 = vor.u32 %v850, %v851
  %v853 = vsel %vm830, %v849, %v852
  %v854 = vrot.slane %v852, 4
  %v855 = vshrl.u32 %v29, 16
  %v857 = vrot.slane %v855, 5
  %v858 = vrot.slane %v99, 6
  %v859 = vor.u32 %v857, %v858
  %v860 = vsel %vm830, %v854, %v859
  %v861 = vrot.slane %v104, 5
  %v862 = vrot.slane %v107, 6
  %v863 = vor.u32 %v861, %v862
  %v864 = vrot.slane %v863, 4
  %v865 = vrot.slane %v117, 5
  %v866 = vrot.slane %v113, 6
  %v867 = vor.u32 %v865, %v866
  %v868 = vsel %vm830, %v864, %v867
  %v869 = vrot.slane %v867, 4
  %v870 = vshrl.u32 %v32, 16
  %v872 = vrot.slane %v870, 5
  %v873 = vrot.slane %v123, 6
  %v874 = vor.u32 %v872, %v873
  %v875 = vsel %vm830, %v869, %v874
  %v876 = vrot.slane %v128, 5
  %v877 = vrot.slane %v131, 6
  %v878 = vor.u32 %v876, %v877
  %v879 = vrot.slane %v878, 4
  %v880 = vrot.slane %v141, 5
  %v881 = vrot.slane %v137, 6
  %v882 = vor.u32 %v880, %v881
  %v883 = vsel %vm830, %v879, %v882
  %v884 = vrot.slane %v882, 4
  %v885 = vshrl.u32 %v35, 16
  %v887 = vrot.slane %v885, 5
  %v888 = vrot.slane %v147, 6
  %v889 = vor.u32 %v887, %v888
  %v890 = vsel %vm830, %v884, %v889
  %v891 = vrot.slane %v152, 5
  %v892 = vrot.slane %v155, 6
  %v893 = vor.u32 %v891, %v892
  %v894 = vrot.slane %v893, 4
  %v895 = vrot.slane %v165, 5
  %v896 = vrot.slane %v161, 6
  %v897 = vor.u32 %v895, %v896
  %v898 = vsel %vm830, %v894, %v897
  %v899 = vrot.slane %v897, 4
  %v900 = vshrl.u32 %v38, 16
  %v902 = vrot.slane %v900, 5
  %v903 = vrot.slane %v171, 6
  %v904 = vor.u32 %v902, %v903
  %v905 = vsel %vm830, %v899, %v904
  %v906 = vrot.slane %v176, 5
  %v907 = vrot.slane %v179, 6
  %v908 = vor.u32 %v906, %v907
  %v909 = vrot.slane %v908, 4
  %v910 = vrot.slane %v189, 5
  %v911 = vrot.slane %v185, 6
  %v912 = vor.u32 %v910, %v911
  %v913 = vsel %vm830, %v909, %v912
  %v914 = vrot.slane %v912, 4
  %v915 = vshrl.u32 %v41, 16
  %v917 = vrot.slane %v915, 5
  %v918 = vrot.slane %v195, 6
  %v919 = vor.u32 %v917, %v918
  %v920 = vsel %vm830, %v914, %v919
  %v921 = vrot.slane %v200, 5
  %v922 = vrot.slane %v203, 6
  %v923 = vor.u32 %v921, %v922
  %v924 = vrot.slane %v923, 4
  %v925 = vrot.slane %v213, 5
  %v926 = vrot.slane %v209, 6
  %v927 = vor.u32 %v925, %v926
  %v928 = vsel %vm830, %v924, %v927
  %v929 = vrot.slane %v927, 4
  %v930 = vshrl.u32 %v44, 16
  %v932 = vrot.slane %v930, 5
  %v933 = vrot.slane %v219, 6
  %v934 = vor.u32 %v932, %v933
  %v935 = vsel %vm830, %v929, %v934
  %v936 = vrot.slane %v224, 5
  %v937 = vrot.slane %v227, 6
  %v938 = vor.u32 %v936, %v937
  %v939 = vrot.slane %v938, 4
  %v940 = vrot.slane %v237, 5
  %v941 = vrot.slane %v233, 6
  %v942 = vor.u32 %v940, %v941
  %v943 = vsel %vm830, %v939, %v942
  %v944 = vrot.slane %v942, 4
  %v945 = vshrl.u32 %v47, 16
  %v947 = vrot.slane %v945, 5
  %v948 = vrot.slane %v243, 6
  %v949 = vor.u32 %v947, %v948
  %v950 = vsel %vm830, %v944, %v949
  %s951 = scalar_lea.vmem %s1, 48
  %v952 = vld [vmem:[%s951] sm:$0xf]
  %v953 = vld [vmem:[%s951 + $0x4] sm:$0xf]
  %v954 = vld [vmem:[%s951 + $0x8] sm:$0xf]
  %v955 = vld [vmem:[%s951 + $0xc] sm:$0xf]
  %v956 = vunpack.c.l.b16 %v838
  %v957 = vunpack.c.l.b16 %v845
  %v958 = vunpack.c.l.b16 %v853
  %v959 = vunpack.c.l.b16 %v860
  %v960 = vunpack.c.l.b16 %v868
  %v961 = vunpack.c.l.b16 %v875
  %v962 = vunpack.c.l.b16 %v883
  %v963 = vunpack.c.l.b16 %v890
  %v964 = vunpack.c.l.b16 %v898
  %v965 = vunpack.c.l.b16 %v905
  %v966 = vunpack.c.l.b16 %v913
  %v967 = vunpack.c.l.b16 %v920
  %v968 = vunpack.c.l.b16 %v928
  %v969 = vunpack.c.l.b16 %v935
  %v970 = vunpack.c.l.b16 %v943
  %v971 = vunpack.c.l.b16 %v950
  %v972 = vpack.c.b16 %v957, %v956
  %v973 = vpack.c.b16 %v959, %v958
  %v974 = vpack.c.b16 %v961, %v960
  %v975 = vpack.c.b16 %v963, %v962
  %v976 = vpack.c.b16 %v965, %v964
  %v977 = vpack.c.b16 %v967, %v966
  %v978 = vpack.c.b16 %v969, %v968
  %v979 = vpack.c.b16 %v971, %v970
  %v984 = vunpack.c.l.b16 %v952
  %v985 = vunpack.c.l.b16 %v953
  %v986 = vunpack.c.l.b16 %v954
  %v987 = vunpack.c.l.b16 %v955
  %v988 = vpack.c.b16 %v985, %v984
  %v989 = vpack.c.b16 %v987, %v986
  %v993 = vsel %vm288, %v972, 0
  %v996 = vsel %vm288, %v973, 0
  %v999 = vsel %vm288, %v974, 0
  %v1002 = vsel %vm288, %v975, 0
  %v1005 = vsel %vm288, %v976, 0
  %v1008 = vsel %vm288, %v977, 0
  %v1011 = vsel %vm288, %v978, 0
  %v1014 = vsel %vm288, %v979, 0
  %1016 = vmatprep.subr.bf16.mxu0 0
  %1017 = vmatpush1.bf16.msra.mxu0 0
  %1018 = vmatprep.subr.bf16.mxu0 0
  %1019 = vmatpush1.bf16.msra.mxu0 0
  %1020 = vmatprep.subr.bf16.mxu0 0
  %1021 = vmatpush1.bf16.msra.mxu0 0
  %1022 = vmatprep.subr.bf16.mxu0 0
  %1023 = vmatpush1.bf16.msra.mxu0 0
  %1024 = vmatprep.subr.bf16.mxu0 0
  %1025 = vmatpush1.bf16.msra.mxu0 0
  %1026 = vmatprep.subr.bf16.mxu0 0
  %1027 = vmatpush1.bf16.msra.mxu0 0
  %1028 = vmatprep.subr.bf16.mxu0 0
  %1029 = vmatpush1.bf16.msra.mxu0 %v989
  %1030 = vmatprep.subr.bf16.mxu0 0
  %1031 = vmatpush1.bf16.msra.mxu0 %v988
  %1032 = vmatprep.subr.bf16.mxu0 0
  %1033 = vmatpush2.bf16.msra.mxu0 0
  %1034 = vmatprep.subr.bf16.mxu0 0
  %1035 = vmatpush2.bf16.msra.mxu0 0
  %1036 = vmatprep.subr.bf16.mxu0 0
  %1037 = vmatpush2.bf16.msra.mxu0 0
  %1038 = vmatprep.subr.bf16.mxu0 0
  %1039 = vmatpush2.bf16.msra.mxu0 0
  %1040 = vmatprep.subr.bf16.mxu0 0
  %1041 = vmatpush2.bf16.msra.mxu0 0
  %1042 = vmatprep.subr.bf16.mxu0 0
  %1043 = vmatpush2.bf16.msra.mxu0 0
  %1044 = vmatprep.subr.bf16.mxu0 0
  %1045 = vmatpush2.bf16.msra.mxu0 0
  %1046 = vmatprep.subr.bf16.mxu0 0
  %1047 = vmatpush2.bf16.msra.mxu0 0
  %1048 = vmatprep.mubr.bf16.mxu0 0
  %1049 = vmatmul.mubr.bf16.gmra.mxu0 %v993
  %v1050 = vpop.f32.mrf.mxu0
  %v1051 = vadd.f32 0.0, %v1050
  %v1052 = vpop.f32.mrf.mxu0
  %v1053 = vpop.f32.mrf.mxu0
  %v1054 = vadd.f32 0.0, %v1053
  %v1055 = vpop.f32.mrf.mxu0
  %1056 = vmatprep.mubr.bf16.mxu0 0
  %1057 = vmatmul.mubr.bf16.gmra.mxu0 %v996
  %v1058 = vpop.f32.mrf.mxu0
  %v1059 = vadd.f32 0.0, %v1058
  %v1060 = vpop.f32.mrf.mxu0
  %v1061 = vpop.f32.mrf.mxu0
  %v1062 = vadd.f32 0.0, %v1061
  %v1063 = vpop.f32.mrf.mxu0
  %1064 = vmatprep.mubr.bf16.mxu0 0
  %1065 = vmatmul.mubr.bf16.gmra.mxu0 %v999
  %v1066 = vpop.f32.mrf.mxu0
  %v1067 = vadd.f32 0.0, %v1066
  %v1068 = vpop.f32.mrf.mxu0
  %v1069 = vpop.f32.mrf.mxu0
  %v1070 = vadd.f32 0.0, %v1069
  %v1071 = vpop.f32.mrf.mxu0
  %1072 = vmatprep.mubr.bf16.mxu0 0
  %1073 = vmatmul.mubr.bf16.gmra.mxu0 %v1002
  %v1074 = vpop.f32.mrf.mxu0
  %v1075 = vadd.f32 0.0, %v1074
  %v1076 = vpop.f32.mrf.mxu0
  %v1077 = vpop.f32.mrf.mxu0
  %v1078 = vadd.f32 0.0, %v1077
  %v1079 = vpop.f32.mrf.mxu0
  %1080 = vmatprep.mubr.bf16.mxu0 0
  %1081 = vmatmul.mubr.bf16.gmra.mxu0 %v1005
  %v1082 = vpop.f32.mrf.mxu0
  %v1083 = vadd.f32 0.0, %v1082
  %v1084 = vpop.f32.mrf.mxu0
  %v1085 = vpop.f32.mrf.mxu0
  %v1086 = vadd.f32 0.0, %v1085
  %v1087 = vpop.f32.mrf.mxu0
  %1088 = vmatprep.mubr.bf16.mxu0 0
  %1089 = vmatmul.mubr.bf16.gmra.mxu0 %v1008
  %v1090 = vpop.f32.mrf.mxu0
  %v1091 = vadd.f32 0.0, %v1090
  %v1092 = vpop.f32.mrf.mxu0
  %v1093 = vpop.f32.mrf.mxu0
  %v1094 = vadd.f32 0.0, %v1093
  %v1095 = vpop.f32.mrf.mxu0
  %1096 = vmatprep.mubr.bf16.mxu0 0
  %1097 = vmatmul.mubr.bf16.gmra.mxu0 %v1011
  %v1098 = vpop.f32.mrf.mxu0
  %v1099 = vadd.f32 0.0, %v1098
  %v1100 = vpop.f32.mrf.mxu0
  %v1101 = vpop.f32.mrf.mxu0
  %v1102 = vadd.f32 0.0, %v1101
  %v1103 = vpop.f32.mrf.mxu0
  %1104 = vmatprep.mubr.bf16.mxu0 0
  %1105 = vmatmul.mubr.bf16.gmra.mxu0 %v1014
  %v1106 = vpop.f32.mrf.mxu0
  %v1107 = vadd.f32 0.0, %v1106
  %v1108 = vpop.f32.mrf.mxu0
  %v1109 = vpop.f32.mrf.mxu0
  %v1110 = vadd.f32 0.0, %v1109
  %v1111 = vpop.f32.mrf.mxu0
  %1112 = vdwg.mxu0
  %v1113 = vadd.f32 %v812, %v1051
  %v1114 = vadd.f32 %v813, %v1054
  %v1115 = vadd.f32 %v814, %v1059
  %v1116 = vadd.f32 %v815, %v1062
  %v1117 = vadd.f32 %v816, %v1067
  %v1118 = vadd.f32 %v817, %v1070
  %v1119 = vadd.f32 %v818, %v1075
  %v1120 = vadd.f32 %v819, %v1078
  %v1121 = vadd.f32 %v820, %v1083
  %v1122 = vadd.f32 %v821, %v1086
  %v1123 = vadd.f32 %v822, %v1091
  %v1124 = vadd.f32 %v823, %v1094
  %v1125 = vadd.f32 %v824, %v1099
  %v1126 = vadd.f32 %v825, %v1102
  %v1127 = vadd.f32 %v826, %v1107
  %v1128 = vadd.f32 %v827, %v1110
  %vm1129 = vcmask 1041408
  %vm1130 = vcmask 1045508
  %vm1131 = vmor %vm1129, %vm1130
  %v1132 = vrot.slane %v24, 6
  %v1133 = vrot.slane %v1132, 4
  %v1134 = vrot.slane %v25, 6
  %v1135 = vsel %vm1131, %v1133, %v1134
  %v1136 = vrot.slane %v1134, 4
  %v1137 = vrot.slane %v26, 6
  %v1138 = vsel %vm1131, %v1136, %v1137
  %v1139 = vrot.slane %v27, 6
  %v1140 = vrot.slane %v1139, 4
  %v1141 = vrot.slane %v28, 6
  %v1142 = vsel %vm1131, %v1140, %v1141
  %v1143 = vrot.slane %v1141, 4
  %v1144 = vrot.slane %v29, 6
  %v1145 = vsel %vm1131, %v1143, %v1144
  %v1146 = vrot.slane %v30, 6
  %v1147 = vrot.slane %v1146, 4
  %v1148 = vrot.slane %v31, 6
  %v1149 = vsel %vm1131, %v1147, %v1148
  %v1150 = vrot.slane %v1148, 4
  %v1151 = vrot.slane %v32, 6
  %v1152 = vsel %vm1131, %v1150, %v1151
  %v1153 = vrot.slane %v33, 6
  %v1154 = vrot.slane %v1153, 4
  %v1155 = vrot.slane %v34, 6
  %v1156 = vsel %vm1131, %v1154, %v1155
  %v1157 = vrot.slane %v1155, 4
  %v1158 = vrot.slane %v35, 6
  %v1159 = vsel %vm1131, %v1157, %v1158
  %v1160 = vrot.slane %v36, 6
  %v1161 = vrot.slane %v1160, 4
  %v1162 = vrot.slane %v37, 6
  %v1163 = vsel %vm1131, %v1161, %v1162
  %v1164 = vrot.slane %v1162, 4
  %v1165 = vrot.slane %v38, 6
  %v1166 = vsel %vm1131, %v1164, %v1165
  %v1167 = vrot.slane %v39, 6
  %v1168 = vrot.slane %v1167, 4
  %v1169 = vrot.slane %v40, 6
  %v1170 = vsel %vm1131, %v1168, %v1169
  %v1171 = vrot.slane %v1169, 4
  %v1172 = vrot.slane %v41, 6
  %v1173 = vsel %vm1131, %v1171, %v1172
  %v1174 = vrot.slane %v42, 6
  %v1175 = vrot.slane %v1174, 4
  %v1176 = vrot.slane %v43, 6
  %v1177 = vsel %vm1131, %v1175, %v1176
  %v1178 = vrot.slane %v1176, 4
  %v1179 = vrot.slane %v44, 6
  %v1180 = vsel %vm1131, %v1178, %v1179
  %v1181 = vrot.slane %v45, 6
  %v1182 = vrot.slane %v1181, 4
  %v1183 = vrot.slane %v46, 6
  %v1184 = vsel %vm1131, %v1182, %v1183
  %v1185 = vrot.slane %v1183, 4
  %v1186 = vrot.slane %v47, 6
  %v1187 = vsel %vm1131, %v1185, %v1186
  %s1188 = scalar_lea.vmem %s1, 64
  %v1189 = vld [vmem:[%s1188] sm:$0xf]
  %v1190 = vld [vmem:[%s1188 + $0x4] sm:$0xf]
  %v1191 = vld [vmem:[%s1188 + $0x8] sm:$0xf]
  %v1192 = vld [vmem:[%s1188 + $0xc] sm:$0xf]
  %v1193 = vunpack.c.l.b16 %v1135
  %v1194 = vunpack.c.l.b16 %v1138
  %v1195 = vunpack.c.l.b16 %v1142
  %v1196 = vunpack.c.l.b16 %v1145
  %v1197 = vunpack.c.l.b16 %v1149
  %v1198 = vunpack.c.l.b16 %v1152
  %v1199 = vunpack.c.l.b16 %v1156
  %v1200 = vunpack.c.l.b16 %v1159
  %v1201 = vunpack.c.l.b16 %v1163
  %v1202 = vunpack.c.l.b16 %v1166
  %v1203 = vunpack.c.l.b16 %v1170
  %v1204 = vunpack.c.l.b16 %v1173
  %v1205 = vunpack.c.l.b16 %v1177
  %v1206 = vunpack.c.l.b16 %v1180
  %v1207 = vunpack.c.l.b16 %v1184
  %v1208 = vunpack.c.l.b16 %v1187
  %v1209 = vpack.c.b16 %v1194, %v1193
  %v1210 = vpack.c.b16 %v1196, %v1195
  %v1211 = vpack.c.b16 %v1198, %v1197
  %v1212 = vpack.c.b16 %v1200, %v1199
  %v1213 = vpack.c.b16 %v1202, %v1201
  %v1214 = vpack.c.b16 %v1204, %v1203
  %v1215 = vpack.c.b16 %v1206, %v1205
  %v1216 = vpack.c.b16 %v1208, %v1207
  %v1221 = vunpack.c.l.b16 %v1189
  %v1222 = vunpack.c.l.b16 %v1190
  %v1223 = vunpack.c.l.b16 %v1191
  %v1224 = vunpack.c.l.b16 %v1192
  %v1225 = vpack.c.b16 %v1222, %v1221
  %v1226 = vpack.c.b16 %v1224, %v1223
  %v1230 = vsel %vm288, %v1209, 0
  %v1233 = vsel %vm288, %v1210, 0
  %v1236 = vsel %vm288, %v1211, 0
  %v1239 = vsel %vm288, %v1212, 0
  %v1242 = vsel %vm288, %v1213, 0
  %v1245 = vsel %vm288, %v1214, 0
  %v1248 = vsel %vm288, %v1215, 0
  %v1251 = vsel %vm288, %v1216, 0
  %1253 = vmatprep.subr.bf16.mxu0 0
  %1254 = vmatpush1.bf16.msra.mxu0 0
  %1255 = vmatprep.subr.bf16.mxu0 0
  %1256 = vmatpush1.bf16.msra.mxu0 0
  %1257 = vmatprep.subr.bf16.mxu0 0
  %1258 = vmatpush1.bf16.msra.mxu0 0
  %1259 = vmatprep.subr.bf16.mxu0 0
  %1260 = vmatpush1.bf16.msra.mxu0 0
  %1261 = vmatprep.subr.bf16.mxu0 0
  %1262 = vmatpush1.bf16.msra.mxu0 0
  %1263 = vmatprep.subr.bf16.mxu0 0
  %1264 = vmatpush1.bf16.msra.mxu0 0
  %1265 = vmatprep.subr.bf16.mxu0 0
  %1266 = vmatpush1.bf16.msra.mxu0 %v1226
  %1267 = vmatprep.subr.bf16.mxu0 0
  %1268 = vmatpush1.bf16.msra.mxu0 %v1225
  %1269 = vmatprep.subr.bf16.mxu0 0
  %1270 = vmatpush2.bf16.msra.mxu0 0
  %1271 = vmatprep.subr.bf16.mxu0 0
  %1272 = vmatpush2.bf16.msra.mxu0 0
  %1273 = vmatprep.subr.bf16.mxu0 0
  %1274 = vmatpush2.bf16.msra.mxu0 0
  %1275 = vmatprep.subr.bf16.mxu0 0
  %1276 = vmatpush2.bf16.msra.mxu0 0
  %1277 = vmatprep.subr.bf16.mxu0 0
  %1278 = vmatpush2.bf16.msra.mxu0 0
  %1279 = vmatprep.subr.bf16.mxu0 0
  %1280 = vmatpush2.bf16.msra.mxu0 0
  %1281 = vmatprep.subr.bf16.mxu0 0
  %1282 = vmatpush2.bf16.msra.mxu0 0
  %1283 = vmatprep.subr.bf16.mxu0 0
  %1284 = vmatpush2.bf16.msra.mxu0 0
  %1285 = vmatprep.mubr.bf16.mxu0 0
  %1286 = vmatmul.mubr.bf16.gmra.mxu0 %v1230
  %v1287 = vpop.f32.mrf.mxu0
  %v1288 = vadd.f32 0.0, %v1287
  %v1289 = vpop.f32.mrf.mxu0
  %v1290 = vpop.f32.mrf.mxu0
  %v1291 = vadd.f32 0.0, %v1290
  %v1292 = vpop.f32.mrf.mxu0
  %1293 = vmatprep.mubr.bf16.mxu0 0
  %1294 = vmatmul.mubr.bf16.gmra.mxu0 %v1233
  %v1295 = vpop.f32.mrf.mxu0
  %v1296 = vadd.f32 0.0, %v1295
  %v1297 = vpop.f32.mrf.mxu0
  %v1298 = vpop.f32.mrf.mxu0
  %v1299 = vadd.f32 0.0, %v1298
  %v1300 = vpop.f32.mrf.mxu0
  %1301 = vmatprep.mubr.bf16.mxu0 0
  %1302 = vmatmul.mubr.bf16.gmra.mxu0 %v1236
  %v1303 = vpop.f32.mrf.mxu0
  %v1304 = vadd.f32 0.0, %v1303
  %v1305 = vpop.f32.mrf.mxu0
  %v1306 = vpop.f32.mrf.mxu0
  %v1307 = vadd.f32 0.0, %v1306
  %v1308 = vpop.f32.mrf.mxu0
  %1309 = vmatprep.mubr.bf16.mxu0 0
  %1310 = vmatmul.mubr.bf16.gmra.mxu0 %v1239
  %v1311 = vpop.f32.mrf.mxu0
  %v1312 = vadd.f32 0.0, %v1311
  %v1313 = vpop.f32.mrf.mxu0
  %v1314 = vpop.f32.mrf.mxu0
  %v1315 = vadd.f32 0.0, %v1314
  %v1316 = vpop.f32.mrf.mxu0
  %1317 = vmatprep.mubr.bf16.mxu0 0
  %1318 = vmatmul.mubr.bf16.gmra.mxu0 %v1242
  %v1319 = vpop.f32.mrf.mxu0
  %v1320 = vadd.f32 0.0, %v1319
  %v1321 = vpop.f32.mrf.mxu0
  %v1322 = vpop.f32.mrf.mxu0
  %v1323 = vadd.f32 0.0, %v1322
  %v1324 = vpop.f32.mrf.mxu0
  %1325 = vmatprep.mubr.bf16.mxu0 0
  %1326 = vmatmul.mubr.bf16.gmra.mxu0 %v1245
  %v1327 = vpop.f32.mrf.mxu0
  %v1328 = vadd.f32 0.0, %v1327
  %v1329 = vpop.f32.mrf.mxu0
  %v1330 = vpop.f32.mrf.mxu0
  %v1331 = vadd.f32 0.0, %v1330
  %v1332 = vpop.f32.mrf.mxu0
  %1333 = vmatprep.mubr.bf16.mxu0 0
  %1334 = vmatmul.mubr.bf16.gmra.mxu0 %v1248
  %v1335 = vpop.f32.mrf.mxu0
  %v1336 = vadd.f32 0.0, %v1335
  %v1337 = vpop.f32.mrf.mxu0
  %v1338 = vpop.f32.mrf.mxu0
  %v1339 = vadd.f32 0.0, %v1338
  %v1340 = vpop.f32.mrf.mxu0
  %1341 = vmatprep.mubr.bf16.mxu0 0
  %1342 = vmatmul.mubr.bf16.gmra.mxu0 %v1251
  %v1343 = vpop.f32.mrf.mxu0
  %v1344 = vadd.f32 0.0, %v1343
  %v1345 = vpop.f32.mrf.mxu0
  %v1346 = vpop.f32.mrf.mxu0
  %v1347 = vadd.f32 0.0, %v1346
  %v1348 = vpop.f32.mrf.mxu0
  %1349 = vdwg.mxu0
  %v1350 = vadd.f32 %v1113, %v1288
  %v1351 = vadd.f32 %v1114, %v1291
  %v1352 = vadd.f32 %v1115, %v1296
  %v1353 = vadd.f32 %v1116, %v1299
  %v1354 = vadd.f32 %v1117, %v1304
  %v1355 = vadd.f32 %v1118, %v1307
  %v1356 = vadd.f32 %v1119, %v1312
  %v1357 = vadd.f32 %v1120, %v1315
  %v1358 = vadd.f32 %v1121, %v1320
  %v1359 = vadd.f32 %v1122, %v1323
  %v1360 = vadd.f32 %v1123, %v1328
  %v1361 = vadd.f32 %v1124, %v1331
  %v1362 = vadd.f32 %v1125, %v1336
  %v1363 = vadd.f32 %v1126, %v1339
  %v1364 = vadd.f32 %v1127, %v1344
  %v1365 = vadd.f32 %v1128, %v1347
  %v1366 = vld [vmem:[%s2] sm:$0x1]
  %v1368 = vlaneseq
  %v1369 = vshrl.u32 %v1368, 7
  %v1370 = vsub.s32 0, %v1369
  %v1371 = vrot.slane %v1366, %v1370
  %v1373 = vadd.f32 %v1350, %v1371
  %v1374 = vadd.f32 %v1351, %v1371
  %v1375 = vadd.f32 %v1352, %v1371
  %v1376 = vadd.f32 %v1353, %v1371
  %v1377 = vadd.f32 %v1354, %v1371
  %v1378 = vadd.f32 %v1355, %v1371
  %v1379 = vadd.f32 %v1356, %v1371
  %v1380 = vadd.f32 %v1357, %v1371
  %v1381 = vadd.f32 %v1358, %v1371
  %v1382 = vadd.f32 %v1359, %v1371
  %v1383 = vadd.f32 %v1360, %v1371
  %v1384 = vadd.f32 %v1361, %v1371
  %v1385 = vadd.f32 %v1362, %v1371
  %v1386 = vadd.f32 %v1363, %v1371
  %v1387 = vadd.f32 %v1364, %v1371
  %v1388 = vadd.f32 %v1365, %v1371
  %v1389 = vmax.f32 %v1373, 0.0
  %v1390 = vmax.f32 %v1374, 0.0
  %v1391 = vmax.f32 %v1375, 0.0
  %v1392 = vmax.f32 %v1376, 0.0
  %v1393 = vmax.f32 %v1377, 0.0
  %v1394 = vmax.f32 %v1378, 0.0
  %v1395 = vmax.f32 %v1379, 0.0
  %v1396 = vmax.f32 %v1380, 0.0
  %v1397 = vmax.f32 %v1381, 0.0
  %v1398 = vmax.f32 %v1382, 0.0
  %v1399 = vmax.f32 %v1383, 0.0
  %v1400 = vmax.f32 %v1384, 0.0
  %v1401 = vmax.f32 %v1385, 0.0
  %v1402 = vmax.f32 %v1386, 0.0
  %v1403 = vmax.f32 %v1387, 0.0
  %v1404 = vmax.f32 %v1388, 0.0
  %v1405 = vld [vmem:[%s3] sm:$0xff]
  %v1406 = vld [vmem:[%s3 + $0x8] sm:$0xff]
  %v1407 = vmul.f32 %v1389, %v1405
  %v1408 = vmul.f32 %v1390, %v1406
  %v1409 = vmul.f32 %v1391, %v1405
  %v1410 = vmul.f32 %v1392, %v1406
  %v1411 = vmul.f32 %v1393, %v1405
  %v1412 = vmul.f32 %v1394, %v1406
  %v1413 = vmul.f32 %v1395, %v1405
  %v1414 = vmul.f32 %v1396, %v1406
  %v1415 = vmul.f32 %v1397, %v1405
  %v1416 = vmul.f32 %v1398, %v1406
  %v1417 = vmul.f32 %v1399, %v1405
  %v1418 = vmul.f32 %v1400, %v1406
  %v1419 = vmul.f32 %v1401, %v1405
  %v1420 = vmul.f32 %v1402, %v1406
  %v1421 = vmul.f32 %v1403, %v1405
  %v1422 = vmul.f32 %v1404, %v1406
  %v1423 = vmax.f32 %v1407, %v1408
  %v1424 = vrot.slane %v1423, 4
  %v1425 = vmax.f32 %v1423, %v1424
  %v1426 = vrot.slane %v1425, 2
  %v1427 = vmax.f32 %v1425, %v1426
  %v1428 = vrot.slane %v1427, 1
  %v1429 = vmax.f32 %v1427, %v1428
  %v1430 = vmax.f32 %v1409, %v1410
  %v1431 = vrot.slane %v1430, 4
  %v1432 = vmax.f32 %v1430, %v1431
  %v1433 = vrot.slane %v1432, 2
  %v1434 = vmax.f32 %v1432, %v1433
  %v1435 = vrot.slane %v1434, 1
  %v1436 = vmax.f32 %v1434, %v1435
  %v1437 = vmax.f32 %v1411, %v1412
  %v1438 = vrot.slane %v1437, 4
  %v1439 = vmax.f32 %v1437, %v1438
  %v1440 = vrot.slane %v1439, 2
  %v1441 = vmax.f32 %v1439, %v1440
  %v1442 = vrot.slane %v1441, 1
  %v1443 = vmax.f32 %v1441, %v1442
  %v1444 = vmax.f32 %v1413, %v1414
  %v1445 = vrot.slane %v1444, 4
  %v1446 = vmax.f32 %v1444, %v1445
  %v1447 = vrot.slane %v1446, 2
  %v1448 = vmax.f32 %v1446, %v1447
  %v1449 = vrot.slane %v1448, 1
  %v1450 = vmax.f32 %v1448, %v1449
  %v1451 = vmax.f32 %v1415, %v1416
  %v1452 = vrot.slane %v1451, 4
  %v1453 = vmax.f32 %v1451, %v1452
  %v1454 = vrot.slane %v1453, 2
  %v1455 = vmax.f32 %v1453, %v1454
  %v1456 = vrot.slane %v1455, 1
  %v1457 = vmax.f32 %v1455, %v1456
  %v1458 = vmax.f32 %v1417, %v1418
  %v1459 = vrot.slane %v1458, 4
  %v1460 = vmax.f32 %v1458, %v1459
  %v1461 = vrot.slane %v1460, 2
  %v1462 = vmax.f32 %v1460, %v1461
  %v1463 = vrot.slane %v1462, 1
  %v1464 = vmax.f32 %v1462, %v1463
  %v1465 = vmax.f32 %v1419, %v1420
  %v1466 = vrot.slane %v1465, 4
  %v1467 = vmax.f32 %v1465, %v1466
  %v1468 = vrot.slane %v1467, 2
  %v1469 = vmax.f32 %v1467, %v1468
  %v1470 = vrot.slane %v1469, 1
  %v1471 = vmax.f32 %v1469, %v1470
  %v1472 = vmax.f32 %v1421, %v1422
  %v1473 = vrot.slane %v1472, 4
  %v1474 = vmax.f32 %v1472, %v1473
  %v1475 = vrot.slane %v1474, 2
  %v1476 = vmax.f32 %v1474, %v1475
  %v1477 = vrot.slane %v1476, 1
  %v1478 = vmax.f32 %v1476, %v1477
  %v1479 = vld [vmem:[%s4] sm:$0xff]
  %v1480 = vld [vmem:[%s4 + $0x8] sm:$0xff]
  %v1481 = vld [vmem:[%s4 + $0x10] sm:$0xff]
  %v1482 = vld [vmem:[%s4 + $0x18] sm:$0xff]
  %v1483 = vld [vmem:[%s4 + $0x20] sm:$0xff]
  %v1484 = vld [vmem:[%s4 + $0x28] sm:$0xff]
  %v1485 = vld [vmem:[%s4 + $0x30] sm:$0xff]
  %v1486 = vld [vmem:[%s4 + $0x38] sm:$0xff]
  %v1487 = vld [vmem:[%s4 + $0x40] sm:$0xff]
  %v1488 = vld [vmem:[%s4 + $0x48] sm:$0xff]
  %v1489 = vld [vmem:[%s4 + $0x50] sm:$0xff]
  %v1490 = vld [vmem:[%s4 + $0x58] sm:$0xff]
  %v1491 = vld [vmem:[%s4 + $0x60] sm:$0xff]
  %v1492 = vld [vmem:[%s4 + $0x68] sm:$0xff]
  %v1493 = vld [vmem:[%s4 + $0x70] sm:$0xff]
  %v1494 = vld [vmem:[%s4 + $0x78] sm:$0xff]
  %v1495 = vld [vmem:[%s5] sm:$0x1]
  %v1497 = vlaneseq
  %v1498 = vshrl.u32 %v1497, 7
  %v1499 = vsub.s32 0, %v1498
  %v1500 = vrot.slane %v1495, %v1499
  %vm1510 = vcmask 1041409
  %v1511 = vsel %vm1510, %v1436, %v1429
  %vm1512 = vcmask 1042434
  %v1513 = vsel %vm1512, %v1443, %v1511
  %vm1514 = vcmask 1043459
  %v1515 = vsel %vm1514, %v1450, %v1513
  %vm1516 = vcmask 1044484
  %v1517 = vsel %vm1516, %v1457, %v1515
  %vm1518 = vcmask 1045509
  %v1519 = vsel %vm1518, %v1464, %v1517
  %vm1520 = vcmask 1046534
  %v1521 = vsel %vm1520, %v1471, %v1519
  %vm1522 = vcmask 1047559
  %v1523 = vsel %vm1522, %v1478, %v1521
  %1525 = vmatprep.subr.mxu0 0.0
  %1526 = vmatpush1.msra.mxu0 %v1494
  %1527 = vmatprep.subr.mxu0 0.0
  %1528 = vmatpush1.msra.mxu0 %v1493
  %1529 = vmatprep.subr.mxu0 0.0
  %1530 = vmatpush1.msra.mxu0 %v1492
  %1531 = vmatprep.subr.mxu0 0.0
  %1532 = vmatpush1.msra.mxu0 %v1491
  %1533 = vmatprep.subr.mxu0 0.0
  %1534 = vmatpush1.msra.mxu0 %v1490
  %1535 = vmatprep.subr.mxu0 0.0
  %1536 = vmatpush1.msra.mxu0 %v1489
  %1537 = vmatprep.subr.mxu0 0.0
  %1538 = vmatpush1.msra.mxu0 %v1488
  %1539 = vmatprep.subr.mxu0 0.0
  %1540 = vmatpush1.msra.mxu0 %v1487
  %1541 = vmatprep.subr.mxu0 0.0
  %1542 = vmatpush1.msra.mxu0 %v1486
  %1543 = vmatprep.subr.mxu0 0.0
  %1544 = vmatpush1.msra.mxu0 %v1485
  %1545 = vmatprep.subr.mxu0 0.0
  %1546 = vmatpush1.msra.mxu0 %v1484
  %1547 = vmatprep.subr.mxu0 0.0
  %1548 = vmatpush1.msra.mxu0 %v1483
  %1549 = vmatprep.subr.mxu0 0.0
  %1550 = vmatpush1.msra.mxu0 %v1482
  %1551 = vmatprep.subr.mxu0 0.0
  %1552 = vmatpush1.msra.mxu0 %v1481
  %1553 = vmatprep.subr.mxu0 0.0
  %1554 = vmatpush1.msra.mxu0 %v1480
  %1555 = vmatprep.subr.mxu0 0.0
  %1556 = vmatpush1.msra.mxu0 %v1479
  %1557 = vmatprep.subr.mxu0 0.0
  %1558 = vmatpush2.msra.mxu0 0.0
  %1559 = vmatprep.subr.mxu0 0.0
  %1560 = vmatpush2.msra.mxu0 0.0
  %1561 = vmatprep.subr.mxu0 0.0
  %1562 = vmatpush2.msra.mxu0 0.0
  %1563 = vmatprep.subr.mxu0 0.0
  %1564 = vmatpush2.msra.mxu0 0.0
  %1565 = vmatprep.subr.mxu0 0.0
  %1566 = vmatpush2.msra.mxu0 0.0
  %1567 = vmatprep.subr.mxu0 0.0
  %1568 = vmatpush2.msra.mxu0 0.0
  %1569 = vmatprep.subr.mxu0 0.0
  %1570 = vmatpush2.msra.mxu0 0.0
  %1571 = vmatprep.subr.mxu0 0.0
  %1572 = vmatpush2.msra.mxu0 0.0
  %1573 = vmatprep.subr.mxu0 0.0
  %1574 = vmatpush2.msra.mxu0 0.0
  %1575 = vmatprep.subr.mxu0 0.0
  %1576 = vmatpush2.msra.mxu0 0.0
  %1577 = vmatprep.subr.mxu0 0.0
  %1578 = vmatpush2.msra.mxu0 0.0
  %1579 = vmatprep.subr.mxu0 0.0
  %1580 = vmatpush2.msra.mxu0 0.0
  %1581 = vmatprep.subr.mxu0 0.0
  %1582 = vmatpush2.msra.mxu0 0.0
  %1583 = vmatprep.subr.mxu0 0.0
  %1584 = vmatpush2.msra.mxu0 0.0
  %1585 = vmatprep.subr.mxu0 0.0
  %1586 = vmatpush2.msra.mxu0 0.0
  %1587 = vmatprep.subr.mxu0 0.0
  %1588 = vmatpush2.msra.mxu0 0.0
  %1589 = vmatprep.mubr.f32.mxu0 0.0
  %1590 = vmatmul.mubr.f32.gmra.mxu0 %v1523
  %v1591 = vpop.f32.mrf.mxu0
  %v1592 = vadd.f32 %v1500, %v1591
  %v1593 = vpop.f32.mrf.mxu0
  %1594 = vdwg.mxu0
  %1595 = vst [vmem:[%s6] sm:$0xff] %v1592
  // Predicated region
  $region26: #{cnn_text_forward.1} parent=0 // pred_check
    _
  $region27: #{cnn_text_forward.1} parent=0 // pred_check_branch
    %1597 = sbr.rel (0) target = $region29
  $region28: #{cnn_text_forward.1} parent=0 // pred_region
    _
  $region29: #{cnn_text_forward.1} parent=0 // pred_fallthru
    _
  // Predicated region
  $region30: #{cnn_text_forward.1} parent=0 // pred_check
    _
  $region31: #{cnn_text_forward.1} parent=0 // pred_check_branch
    %1599 = sbr.rel (0) target = $region33
  $region32: #{cnn_text_forward.1} parent=0 // pred_region
    _
  $region33: #{cnn_text_forward.1} parent=0 // pred_fallthru
    _

</llo_original>
